<compile_context>
chip_gen: v6e
topology: v6e:2x2x1
jax: 0.10.0
libtpu: 0.0.40
codegen_flags: <defaults>
</compile_context>

<pallas_src>
import functools

import jax
import jax.numpy as jnp
from jax import lax
from jax.experimental import pallas as pl
from jax.experimental.pallas import tpu as pltpu


def _round_up(x: int, m: int) -> int:
    return (x + m - 1) // m * m


def _lstm_recurrence_kernel(xproj_ref, whh_ref, out_ref, h_ref, c_ref, *,
                            seq_len, chunk, needs_mask, unroll):
    """One grid step = one (batch block, time chunk).

    xproj_ref : (chunk, B_tile, 4*H_pad)   precomputed x@W_ih^T + bias (gate-padded)
    whh_ref   : (H_pad, 4*H_pad)           hidden->gates weights (gate-padded)
    out_ref   : (B_tile, H_pad)            final hidden state (written at last chunk)
    h_ref/c_ref: VMEM scratch (B_tile, H_pad) f32, persists across time chunks.
    """
    t_blk = pl.program_id(1)

    @pl.when(t_blk == 0)
    def _init():
        h_ref[...] = jnp.zeros_like(h_ref)
        c_ref[...] = jnp.zeros_like(c_ref)

    whh = whh_ref[...]                      # (H_pad, 4*H_pad), bf16 or f32
    hp = whh.shape[0]                       # H_pad (lane-aligned gate width)
    chunk_start = t_blk * chunk

    def step(t_local, carry):
        h, c = carry
        x_row = xproj_ref[t_local].astype(jnp.float32)          # (B_tile, 4*H_pad)
        gates = x_row + jnp.dot(h.astype(whh.dtype), whh,
                                preferred_element_type=jnp.float32)
        # Gate slices land on 128-lane boundaries (hp is a multiple of 128).
        i_g = jax.nn.sigmoid(gates[:, 0 * hp:1 * hp])
        f_g = jax.nn.sigmoid(gates[:, 1 * hp:2 * hp])
        g_g = jnp.tanh(gates[:, 2 * hp:3 * hp])
        o_g = jax.nn.sigmoid(gates[:, 3 * hp:4 * hp])
        c_new = f_g * c + i_g * g_g
        h_new = o_g * jnp.tanh(c_new)
        if needs_mask:  # only present when seq_len was padded up to a chunk multiple
            valid = (chunk_start + t_local) < seq_len
            h_new = jnp.where(valid, h_new, h)
            c_new = jnp.where(valid, c_new, c)
        return h_new, c_new

    h, c = lax.fori_loop(0, chunk, step, (h_ref[...], c_ref[...]), unroll=unroll)
    h_ref[...] = h
    c_ref[...] = c

    @pl.when(t_blk == pl.num_programs(1) - 1)
    def _emit():
        out_ref[...] = h.astype(out_ref.dtype)


def shallow_regression_lstm(x, params, *, matmul_dtype=jnp.bfloat16):
    """x: (batch, seq_len, num_features) -> (batch,) — matches the PyTorch forward."""
    w_ih = params["w_ih"].astype(jnp.float32)                    # (4H, F)
    w_hh = params["w_hh"].astype(jnp.float32)                    # (4H, H)
    bias = (params["b_ih"] + params["b_hh"]).astype(jnp.float32)  # (4H,)
    w_lin = params["w_lin"].astype(jnp.float32)                  # (1, H)
    b_lin = params["b_lin"].astype(jnp.float32)                  # (1,)

    B, T, F = x.shape
    H = w_hh.shape[1]

    itemsize = jnp.dtype(matmul_dtype).itemsize
    H_pad = _round_up(H, 128)                       # lane-aligned per-gate width
    B_tile = min(_round_up(B, 8), 128)              # MXU rows per recurrent matmul
    B_pad = _round_up(B, B_tile)

    # Time chunk: keep each streamed (double-buffered) Xproj block <= ~2 MiB.
    bytes_per_step = B_tile * 4 * H_pad * itemsize
    chunk = max(1, min(T, 32, (2 * 1024 * 1024) // bytes_per_step))
    n_chunks = pl.cdiv(T, chunk)
    T_pad = n_chunks * chunk

    # ---- Hoisted input projection: ONE large gemm with the bias folded in ----
    xproj = jnp.einsum("btf,gf->btg", x.astype(jnp.float32), w_ih) + bias  # (B,T,4H)
    xproj = jnp.transpose(xproj, (1, 0, 2))                                 # (T,B,4H)

    # Re-layout so each gate occupies its own 128-lane-aligned H_pad block, and
    # pad T/B so the grid tiles evenly. Zero padding is exact for the LSTM math
    # (padded gate lanes stay at sigmoid(0)/tanh(0) and never perturb h or c).
    xp = xproj.reshape(T, B, 4, H)
    xp = jnp.pad(xp, ((0, T_pad - T), (0, B_pad - B), (0, 0), (0, H_pad - H)))
    xproj_pad = xp.reshape(T_pad, B_pad, 4 * H_pad).astype(matmul_dtype)

    wh = w_hh.T.reshape(H, 4, H)
    wh = jnp.pad(wh, ((0, H_pad - H), (0, 0), (0, H_pad - H)))
    whh_pad = wh.reshape(H_pad, 4 * H_pad).astype(matmul_dtype)

    grid = (B_pad // B_tile, n_chunks)

    kernel = functools.partial(
        _lstm_recurrence_kernel,
        seq_len=T,
        chunk=chunk,
        needs_mask=(T_pad != T),
        unroll=True if chunk <= 16 else 4,
    )

    # VMEM budget: streamed Xproj chunks (x2 buffers) + weights + out + h/c scratch.
    vmem_est = (2 * chunk * B_tile * 4 * H_pad * itemsize
                + 2 * H_pad * 4 * H_pad * itemsize
                + 2 * B_tile * H_pad * 4
                + 2 * B_tile * H_pad * 4)
    # Cap well under v7x's 64 MiB physical VMEM; works for v5e/v6e (128 MiB) too.
    vmem_limit = int(min(48 * 1024 * 1024, max(32 * 1024 * 1024, 2 * vmem_est)))

    h_last = pl.pallas_call(
        kernel,
        out_shape=jax.ShapeDtypeStruct((B_pad, H_pad), jnp.float32),
        grid_spec=pltpu.PrefetchScalarGridSpec(
            num_scalar_prefetch=0,
            grid=grid,
            in_specs=[
                # streamed: next time-chunk DMA overlaps current chunk's compute
                pl.BlockSpec((chunk, B_tile, 4 * H_pad), lambda b, t: (t, b, 0)),
                # resident weights
                pl.BlockSpec((H_pad, 4 * H_pad), lambda b, t: (0, 0)),
            ],
            out_specs=pl.BlockSpec((B_tile, H_pad), lambda b, t: (b, 0)),
            scratch_shapes=[
                pltpu.VMEM((B_tile, H_pad), jnp.float32),   # h
                pltpu.VMEM((B_tile, H_pad), jnp.float32),   # c
            ],
        ),
        compiler_params=pltpu.CompilerParams(
            dimension_semantics=("parallel", "arbitrary"),
            vmem_limit_bytes=vmem_limit,
        ),
    )(xproj_pad, whh_pad)

    # Final (H -> 1) linear: tiny, once per call — plain XLA, keeps the kernel
    # output store lane-dense instead of a masked 1-lane-wide vst.
    y = h_last[:B, :H] @ w_lin.T + b_lin        # (B, 1)
    return y.reshape(B)                          # .flatten() in the PyTorch forward


def init_params(key, num_features, hidden_units):
    """Deterministic init matching PyTorch default shapes (uniform +-1/sqrt(H))."""
    H = hidden_units
    k = 1.0 / jnp.sqrt(jnp.float32(H))
    keys = jax.random.split(key, 6)
    u = lambda kk, shape: jax.random.uniform(kk, shape, jnp.float32, -k, k)
    return {
        "w_ih": u(keys[0], (4 * H, num_features)),   # nn.LSTM weight_ih_l0
        "w_hh": u(keys[1], (4 * H, H)),              # nn.LSTM weight_hh_l0
        "b_ih": u(keys[2], (4 * H,)),                # nn.LSTM bias_ih_l0
        "b_hh": u(keys[3], (4 * H,)),                # nn.LSTM bias_hh_l0
        "w_lin": u(keys[4], (1, H)),                 # nn.Linear weight
        "b_lin": u(keys[5], (1,)),                   # nn.Linear bias
    }


def _reference(x, params):
    """Pure-JAX f32 reference of the same LSTM forward (sanity check)."""
    w_ih, w_hh = params["w_ih"], params["w_hh"]
    b = params["b_ih"] + params["b_hh"]
    H = w_hh.shape[1]
    B, T, F = x.shape
    h = jnp.zeros((B, H), jnp.float32)
    c = jnp.zeros((B, H), jnp.float32)
    for t in range(T):
        g = x[:, t, :] @ w_ih.T + h @ w_hh.T + b
        i = jax.nn.sigmoid(g[:, 0 * H:1 * H])
        f = jax.nn.sigmoid(g[:, 1 * H:2 * H])
        gg = jnp.tanh(g[:, 2 * H:3 * H])
        o = jax.nn.sigmoid(g[:, 3 * H:4 * H])
        c = f * c + i * gg
        h = o * jnp.tanh(c)
    return (h @ params["w_lin"].T + params["b_lin"]).reshape(B)


if __name__ == "__main__":
    batch, seq_len, num_features, hidden_units = 2, 8, 2, 32

    key = jax.random.PRNGKey(0)
    k_x, k_p = jax.random.split(key)
    x = jax.random.normal(k_x, (batch, seq_len, num_features), jnp.float32)
    params = init_params(k_p, num_features, hidden_units)

    # f32 MXU operands: exact semantics check against the PyTorch-style reference.
    out_f32 = jax.block_until_ready(
        shallow_regression_lstm(x, params, matmul_dtype=jnp.float32))
    # Default bf16 MXU operands (f32 accumulate / f32 gate math): perf path.
    out_bf16 = jax.block_until_ready(shallow_regression_lstm(x, params))

    ref = _reference(x, params)
    assert out_f32.shape == (batch,)
    assert out_bf16.shape == (batch,)
    assert jnp.allclose(out_f32, ref, atol=1e-4, rtol=1e-4), (out_f32, ref)
    assert jnp.allclose(out_bf16, ref, atol=5e-2, rtol=5e-2), (out_bf16, ref)

    print("KERNEL_OK")
</pallas_src>

<mosaic_0001>
module attributes {stable_mosaic.version = 11 : i64} {
  func.func @_lstm_recurrence_kernel(%arg0: i32, %arg1: i32, %arg2: memref<8x8x512xf32, #tpu.memory_space<vmem>>, %arg3: memref<128x512xf32, #tpu.memory_space<vmem>>, %arg4: memref<8x128xf32, #tpu.memory_space<vmem>>, %arg5: memref<8x128xf32, #tpu.memory_space<vmem>>, %arg6: memref<8x128xf32, #tpu.memory_space<vmem>>) attributes {dimension_semantics = [#tpu.dimension_semantics<parallel>, #tpu.dimension_semantics<arbitrary>], iteration_bounds = array<i64: 1, 1>, scalar_prefetch = 0 : i64, scratch_operands = 2 : i64, tpu.core_type = #tpu.core_type<tc>, window_params = [{transform_indices = @transform_0, window_bounds = array<i64: 8, 8, 512>}, {pipeline_mode = #tpu.pipeline_mode<synchronous>, transform_indices = @transform_1, window_bounds = array<i64: 128, 512>}, {transform_indices = @transform_2, window_bounds = array<i64: 8, 128>}]} {
    %c0_i32 = arith.constant 0 : i32
    %0 = arith.cmpi eq, %arg1, %c0_i32 : i32
    %1 = arith.extui %0 : i1 to i32
    %c0_i32_0 = arith.constant 0 : i32
    %2 = arith.cmpi ne, %1, %c0_i32_0 : i32
    scf.if %2 {
      %cst_60 = arith.constant 0.000000e+00 : f32
      %251 = vector.broadcast %cst_60 : f32 to vector<8x128xf32>
      %c0_61 = arith.constant 0 : index
      %c0_62 = arith.constant 0 : index
      %252 = vector.load %arg5[%c0_61, %c0_62] : memref<8x128xf32, #tpu.memory_space<vmem>>, vector<8x128xf32>
      tpu.vector_store %arg5[%c0_61, %c0_62], %251 {strides = array<i32>} : memref<8x128xf32, #tpu.memory_space<vmem>>, vector<8x128xf32>,
      %cst_63 = arith.constant 0.000000e+00 : f32
      %253 = vector.broadcast %cst_63 : f32 to vector<8x128xf32>
      %c0_64 = arith.constant 0 : index
      %c0_65 = arith.constant 0 : index
      %254 = vector.load %arg6[%c0_64, %c0_65] : memref<8x128xf32, #tpu.memory_space<vmem>>, vector<8x128xf32>
      tpu.vector_store %arg6[%c0_64, %c0_65], %253 {strides = array<i32>} : memref<8x128xf32, #tpu.memory_space<vmem>>, vector<8x128xf32>,
    } else {
    }
    %c0 = arith.constant 0 : index
    %c0_1 = arith.constant 0 : index
    %3 = vector.load %arg3[%c0, %c0_1] : memref<128x512xf32, #tpu.memory_space<vmem>>, vector<128x512xf32>
    %c0_2 = arith.constant 0 : index
    %c0_3 = arith.constant 0 : index
    %4 = vector.load %arg5[%c0_2, %c0_3] : memref<8x128xf32, #tpu.memory_space<vmem>>, vector<8x128xf32>
    %c0_4 = arith.constant 0 : index
    %c0_5 = arith.constant 0 : index
    %5 = vector.load %arg6[%c0_4, %c0_5] : memref<8x128xf32, #tpu.memory_space<vmem>>, vector<8x128xf32>
    %c0_i32_6 = arith.constant 0 : i32
    %6 = arith.index_cast %c0_i32_6 : i32 to index
    %c0_7 = arith.constant 0 : index
    %c0_8 = arith.constant 0 : index
    %7 = vector.load %arg2[%6, %c0_7, %c0_8] : memref<8x8x512xf32, #tpu.memory_space<vmem>>, vector<1x8x512xf32>
    %8 = vector.shape_cast %7 : vector<1x8x512xf32> to vector<8x512xf32>
    %cst = arith.constant dense<0.000000e+00> : vector<8x512xf32>
    %9 = tpu.matmul %4, %3, %cst {dimension_numbers = #tpu.dot_dimension_numbers<[1], [0], [0], [1], [0, 0, 1, 1], [], []>} : vector<8x128xf32>, vector<128x512xf32>, vector<8x512xf32> -> vector<8x512xf32>
    %10 = arith.addf %8, %9 : vector<8x512xf32>
    %11 = vector.extract_strided_slice %10 {offsets = [0, 0], sizes = [8, 128], strides = [1, 1]} : vector<8x512xf32> to vector<8x128xf32>
    %12 = arith.negf %11 : vector<8x128xf32>
    %13 = math.exp %12 : vector<8x128xf32>
    %cst_9 = arith.constant 1.000000e+00 : f32
    %14 = vector.broadcast %cst_9 : f32 to vector<8x128xf32>
    %15 = arith.addf %14, %13 : vector<8x128xf32>
    %16 = arith.divf %14, %15 : vector<8x128xf32>
    %17 = vector.extract_strided_slice %10 {offsets = [0, 128], sizes = [8, 128], strides = [1, 1]} : vector<8x512xf32> to vector<8x128xf32>
    %18 = arith.negf %17 : vector<8x128xf32>
    %19 = math.exp %18 : vector<8x128xf32>
    %cst_10 = arith.constant 1.000000e+00 : f32
    %20 = vector.broadcast %cst_10 : f32 to vector<8x128xf32>
    %21 = arith.addf %20, %19 : vector<8x128xf32>
    %22 = arith.divf %20, %21 : vector<8x128xf32>
    %23 = vector.extract_strided_slice %10 {offsets = [0, 256], sizes = [8, 128], strides = [1, 1]} : vector<8x512xf32> to vector<8x128xf32>
    %24 = math.tanh %23 : vector<8x128xf32>
    %25 = vector.extract_strided_slice %10 {offsets = [0, 384], sizes = [8, 128], strides = [1, 1]} : vector<8x512xf32> to vector<8x128xf32>
    %26 = arith.negf %25 : vector<8x128xf32>
    %27 = math.exp %26 : vector<8x128xf32>
    %cst_11 = arith.constant 1.000000e+00 : f32
    %28 = vector.broadcast %cst_11 : f32 to vector<8x128xf32>
    %29 = arith.addf %28, %27 : vector<8x128xf32>
    %30 = arith.divf %28, %29 : vector<8x128xf32>
    %31 = arith.mulf %22, %5 : vector<8x128xf32>
    %32 = arith.mulf %16, %24 : vector<8x128xf32>
    %33 = arith.addf %31, %32 : vector<8x128xf32>
    %34 = math.tanh %33 : vector<8x128xf32>
    %35 = arith.mulf %30, %34 : vector<8x128xf32>
    %c1_i32 = arith.constant 1 : i32
    %36 = arith.index_cast %c1_i32 : i32 to index
    %c0_12 = arith.constant 0 : index
    %c0_13 = arith.constant 0 : index
    %37 = vector.load %arg2[%36, %c0_12, %c0_13] : memref<8x8x512xf32, #tpu.memory_space<vmem>>, vector<1x8x512xf32>
    %38 = vector.shape_cast %37 : vector<1x8x512xf32> to vector<8x512xf32>
    %cst_14 = arith.constant dense<0.000000e+00> : vector<8x512xf32>
    %39 = tpu.matmul %35, %3, %cst_14 {dimension_numbers = #tpu.dot_dimension_numbers<[1], [0], [0], [1], [0, 0, 1, 1], [], []>} : vector<8x128xf32>, vector<128x512xf32>, vector<8x512xf32> -> vector<8x512xf32>
    %40 = arith.addf %38, %39 : vector<8x512xf32>
    %41 = vector.extract_strided_slice %40 {offsets = [0, 0], sizes = [8, 128], strides = [1, 1]} : vector<8x512xf32> to vector<8x128xf32>
    %42 = arith.negf %41 : vector<8x128xf32>
    %43 = math.exp %42 : vector<8x128xf32>
    %cst_15 = arith.constant 1.000000e+00 : f32
    %44 = vector.broadcast %cst_15 : f32 to vector<8x128xf32>
    %45 = arith.addf %44, %43 : vector<8x128xf32>
    %46 = arith.divf %44, %45 : vector<8x128xf32>
    %47 = vector.extract_strided_slice %40 {offsets = [0, 128], sizes = [8, 128], strides = [1, 1]} : vector<8x512xf32> to vector<8x128xf32>
    %48 = arith.negf %47 : vector<8x128xf32>
    %49 = math.exp %48 : vector<8x128xf32>
    %cst_16 = arith.constant 1.000000e+00 : f32
    %50 = vector.broadcast %cst_16 : f32 to vector<8x128xf32>
    %51 = arith.addf %50, %49 : vector<8x128xf32>
    %52 = arith.divf %50, %51 : vector<8x128xf32>
    %53 = vector.extract_strided_slice %40 {offsets = [0, 256], sizes = [8, 128], strides = [1, 1]} : vector<8x512xf32> to vector<8x128xf32>
    %54 = math.tanh %53 : vector<8x128xf32>
    %55 = vector.extract_strided_slice %40 {offsets = [0, 384], sizes = [8, 128], strides = [1, 1]} : vector<8x512xf32> to vector<8x128xf32>
    %56 = arith.negf %55 : vector<8x128xf32>
    %57 = math.exp %56 : vector<8x128xf32>
    %cst_17 = arith.constant 1.000000e+00 : f32
    %58 = vector.broadcast %cst_17 : f32 to vector<8x128xf32>
    %59 = arith.addf %58, %57 : vector<8x128xf32>
    %60 = arith.divf %58, %59 : vector<8x128xf32>
    %61 = arith.mulf %52, %33 : vector<8x128xf32>
    %62 = arith.mulf %46, %54 : vector<8x128xf32>
    %63 = arith.addf %61, %62 : vector<8x128xf32>
    %64 = math.tanh %63 : vector<8x128xf32>
    %65 = arith.mulf %60, %64 : vector<8x128xf32>
    %c2_i32 = arith.constant 2 : i32
    %66 = arith.index_cast %c2_i32 : i32 to index
    %c0_18 = arith.constant 0 : index
    %c0_19 = arith.constant 0 : index
    %67 = vector.load %arg2[%66, %c0_18, %c0_19] : memref<8x8x512xf32, #tpu.memory_space<vmem>>, vector<1x8x512xf32>
    %68 = vector.shape_cast %67 : vector<1x8x512xf32> to vector<8x512xf32>
    %cst_20 = arith.constant dense<0.000000e+00> : vector<8x512xf32>
    %69 = tpu.matmul %65, %3, %cst_20 {dimension_numbers = #tpu.dot_dimension_numbers<[1], [0], [0], [1], [0, 0, 1, 1], [], []>} : vector<8x128xf32>, vector<128x512xf32>, vector<8x512xf32> -> vector<8x512xf32>
    %70 = arith.addf %68, %69 : vector<8x512xf32>
    %71 = vector.extract_strided_slice %70 {offsets = [0, 0], sizes = [8, 128], strides = [1, 1]} : vector<8x512xf32> to vector<8x128xf32>
    %72 = arith.negf %71 : vector<8x128xf32>
    %73 = math.exp %72 : vector<8x128xf32>
    %cst_21 = arith.constant 1.000000e+00 : f32
    %74 = vector.broadcast %cst_21 : f32 to vector<8x128xf32>
    %75 = arith.addf %74, %73 : vector<8x128xf32>
    %76 = arith.divf %74, %75 : vector<8x128xf32>
    %77 = vector.extract_strided_slice %70 {offsets = [0, 128], sizes = [8, 128], strides = [1, 1]} : vector<8x512xf32> to vector<8x128xf32>
    %78 = arith.negf %77 : vector<8x128xf32>
    %79 = math.exp %78 : vector<8x128xf32>
    %cst_22 = arith.constant 1.000000e+00 : f32
    %80 = vector.broadcast %cst_22 : f32 to vector<8x128xf32>
    %81 = arith.addf %80, %79 : vector<8x128xf32>
    %82 = arith.divf %80, %81 : vector<8x128xf32>
    %83 = vector.extract_strided_slice %70 {offsets = [0, 256], sizes = [8, 128], strides = [1, 1]} : vector<8x512xf32> to vector<8x128xf32>
    %84 = math.tanh %83 : vector<8x128xf32>
    %85 = vector.extract_strided_slice %70 {offsets = [0, 384], sizes = [8, 128], strides = [1, 1]} : vector<8x512xf32> to vector<8x128xf32>
    %86 = arith.negf %85 : vector<8x128xf32>
    %87 = math.exp %86 : vector<8x128xf32>
    %cst_23 = arith.constant 1.000000e+00 : f32
    %88 = vector.broadcast %cst_23 : f32 to vector<8x128xf32>
    %89 = arith.addf %88, %87 : vector<8x128xf32>
    %90 = arith.divf %88, %89 : vector<8x128xf32>
    %91 = arith.mulf %82, %63 : vector<8x128xf32>
    %92 = arith.mulf %76, %84 : vector<8x128xf32>
    %93 = arith.addf %91, %92 : vector<8x128xf32>
    %94 = math.tanh %93 : vector<8x128xf32>
    %95 = arith.mulf %90, %94 : vector<8x128xf32>
    %c3_i32 = arith.constant 3 : i32
    %96 = arith.index_cast %c3_i32 : i32 to index
    %c0_24 = arith.constant 0 : index
    %c0_25 = arith.constant 0 : index
    %97 = vector.load %arg2[%96, %c0_24, %c0_25] : memref<8x8x512xf32, #tpu.memory_space<vmem>>, vector<1x8x512xf32>
    %98 = vector.shape_cast %97 : vector<1x8x512xf32> to vector<8x512xf32>
    %cst_26 = arith.constant dense<0.000000e+00> : vector<8x512xf32>
    %99 = tpu.matmul %95, %3, %cst_26 {dimension_numbers = #tpu.dot_dimension_numbers<[1], [0], [0], [1], [0, 0, 1, 1], [], []>} : vector<8x128xf32>, vector<128x512xf32>, vector<8x512xf32> -> vector<8x512xf32>
    %100 = arith.addf %98, %99 : vector<8x512xf32>
    %101 = vector.extract_strided_slice %100 {offsets = [0, 0], sizes = [8, 128], strides = [1, 1]} : vector<8x512xf32> to vector<8x128xf32>
    %102 = arith.negf %101 : vector<8x128xf32>
    %103 = math.exp %102 : vector<8x128xf32>
    %cst_27 = arith.constant 1.000000e+00 : f32
    %104 = vector.broadcast %cst_27 : f32 to vector<8x128xf32>
    %105 = arith.addf %104, %103 : vector<8x128xf32>
    %106 = arith.divf %104, %105 : vector<8x128xf32>
    %107 = vector.extract_strided_slice %100 {offsets = [0, 128], sizes = [8, 128], strides = [1, 1]} : vector<8x512xf32> to vector<8x128xf32>
    %108 = arith.negf %107 : vector<8x128xf32>
    %109 = math.exp %108 : vector<8x128xf32>
    %cst_28 = arith.constant 1.000000e+00 : f32
    %110 = vector.broadcast %cst_28 : f32 to vector<8x128xf32>
    %111 = arith.addf %110, %109 : vector<8x128xf32>
    %112 = arith.divf %110, %111 : vector<8x128xf32>
    %113 = vector.extract_strided_slice %100 {offsets = [0, 256], sizes = [8, 128], strides = [1, 1]} : vector<8x512xf32> to vector<8x128xf32>
    %114 = math.tanh %113 : vector<8x128xf32>
    %115 = vector.extract_strided_slice %100 {offsets = [0, 384], sizes = [8, 128], strides = [1, 1]} : vector<8x512xf32> to vector<8x128xf32>
    %116 = arith.negf %115 : vector<8x128xf32>
    %117 = math.exp %116 : vector<8x128xf32>
    %cst_29 = arith.constant 1.000000e+00 : f32
    %118 = vector.broadcast %cst_29 : f32 to vector<8x128xf32>
    %119 = arith.addf %118, %117 : vector<8x128xf32>
    %120 = arith.divf %118, %119 : vector<8x128xf32>
    %121 = arith.mulf %112, %93 : vector<8x128xf32>
    %122 = arith.mulf %106, %114 : vector<8x128xf32>
    %123 = arith.addf %121, %122 : vector<8x128xf32>
    %124 = math.tanh %123 : vector<8x128xf32>
    %125 = arith.mulf %120, %124 : vector<8x128xf32>
    %c4_i32 = arith.constant 4 : i32
    %126 = arith.index_cast %c4_i32 : i32 to index
    %c0_30 = arith.constant 0 : index
    %c0_31 = arith.constant 0 : index
    %127 = vector.load %arg2[%126, %c0_30, %c0_31] : memref<8x8x512xf32, #tpu.memory_space<vmem>>, vector<1x8x512xf32>
    %128 = vector.shape_cast %127 : vector<1x8x512xf32> to vector<8x512xf32>
    %cst_32 = arith.constant dense<0.000000e+00> : vector<8x512xf32>
    %129 = tpu.matmul %125, %3, %cst_32 {dimension_numbers = #tpu.dot_dimension_numbers<[1], [0], [0], [1], [0, 0, 1, 1], [], []>} : vector<8x128xf32>, vector<128x512xf32>, vector<8x512xf32> -> vector<8x512xf32>
    %130 = arith.addf %128, %129 : vector<8x512xf32>
    %131 = vector.extract_strided_slice %130 {offsets = [0, 0], sizes = [8, 128], strides = [1, 1]} : vector<8x512xf32> to vector<8x128xf32>
    %132 = arith.negf %131 : vector<8x128xf32>
    %133 = math.exp %132 : vector<8x128xf32>
    %cst_33 = arith.constant 1.000000e+00 : f32
    %134 = vector.broadcast %cst_33 : f32 to vector<8x128xf32>
    %135 = arith.addf %134, %133 : vector<8x128xf32>
    %136 = arith.divf %134, %135 : vector<8x128xf32>
    %137 = vector.extract_strided_slice %130 {offsets = [0, 128], sizes = [8, 128], strides = [1, 1]} : vector<8x512xf32> to vector<8x128xf32>
    %138 = arith.negf %137 : vector<8x128xf32>
    %139 = math.exp %138 : vector<8x128xf32>
    %cst_34 = arith.constant 1.000000e+00 : f32
    %140 = vector.broadcast %cst_34 : f32 to vector<8x128xf32>
    %141 = arith.addf %140, %139 : vector<8x128xf32>
    %142 = arith.divf %140, %141 : vector<8x128xf32>
    %143 = vector.extract_strided_slice %130 {offsets = [0, 256], sizes = [8, 128], strides = [1, 1]} : vector<8x512xf32> to vector<8x128xf32>
    %144 = math.tanh %143 : vector<8x128xf32>
    %145 = vector.extract_strided_slice %130 {offsets = [0, 384], sizes = [8, 128], strides = [1, 1]} : vector<8x512xf32> to vector<8x128xf32>
    %146 = arith.negf %145 : vector<8x128xf32>
    %147 = math.exp %146 : vector<8x128xf32>
    %cst_35 = arith.constant 1.000000e+00 : f32
    %148 = vector.broadcast %cst_35 : f32 to vector<8x128xf32>
    %149 = arith.addf %148, %147 : vector<8x128xf32>
    %150 = arith.divf %148, %149 : vector<8x128xf32>
    %151 = arith.mulf %142, %123 : vector<8x128xf32>
    %152 = arith.mulf %136, %144 : vector<8x128xf32>
    %153 = arith.addf %151, %152 : vector<8x128xf32>
    %154 = math.tanh %153 : vector<8x128xf32>
    %155 = arith.mulf %150, %154 : vector<8x128xf32>
    %c5_i32 = arith.constant 5 : i32
    %156 = arith.index_cast %c5_i32 : i32 to index
    %c0_36 = arith.constant 0 : index
    %c0_37 = arith.constant 0 : index
    %157 = vector.load %arg2[%156, %c0_36, %c0_37] : memref<8x8x512xf32, #tpu.memory_space<vmem>>, vector<1x8x512xf32>
    %158 = vector.shape_cast %157 : vector<1x8x512xf32> to vector<8x512xf32>
    %cst_38 = arith.constant dense<0.000000e+00> : vector<8x512xf32>
    %159 = tpu.matmul %155, %3, %cst_38 {dimension_numbers = #tpu.dot_dimension_numbers<[1], [0], [0], [1], [0, 0, 1, 1], [], []>} : vector<8x128xf32>, vector<128x512xf32>, vector<8x512xf32> -> vector<8x512xf32>
    %160 = arith.addf %158, %159 : vector<8x512xf32>
    %161 = vector.extract_strided_slice %160 {offsets = [0, 0], sizes = [8, 128], strides = [1, 1]} : vector<8x512xf32> to vector<8x128xf32>
    %162 = arith.negf %161 : vector<8x128xf32>
    %163 = math.exp %162 : vector<8x128xf32>
    %cst_39 = arith.constant 1.000000e+00 : f32
    %164 = vector.broadcast %cst_39 : f32 to vector<8x128xf32>
    %165 = arith.addf %164, %163 : vector<8x128xf32>
    %166 = arith.divf %164, %165 : vector<8x128xf32>
    %167 = vector.extract_strided_slice %160 {offsets = [0, 128], sizes = [8, 128], strides = [1, 1]} : vector<8x512xf32> to vector<8x128xf32>
    %168 = arith.negf %167 : vector<8x128xf32>
    %169 = math.exp %168 : vector<8x128xf32>
    %cst_40 = arith.constant 1.000000e+00 : f32
    %170 = vector.broadcast %cst_40 : f32 to vector<8x128xf32>
    %171 = arith.addf %170, %169 : vector<8x128xf32>
    %172 = arith.divf %170, %171 : vector<8x128xf32>
    %173 = vector.extract_strided_slice %160 {offsets = [0, 256], sizes = [8, 128], strides = [1, 1]} : vector<8x512xf32> to vector<8x128xf32>
    %174 = math.tanh %173 : vector<8x128xf32>
    %175 = vector.extract_strided_slice %160 {offsets = [0, 384], sizes = [8, 128], strides = [1, 1]} : vector<8x512xf32> to vector<8x128xf32>
    %176 = arith.negf %175 : vector<8x128xf32>
    %177 = math.exp %176 : vector<8x128xf32>
    %cst_41 = arith.constant 1.000000e+00 : f32
    %178 = vector.broadcast %cst_41 : f32 to vector<8x128xf32>
    %179 = arith.addf %178, %177 : vector<8x128xf32>
    %180 = arith.divf %178, %179 : vector<8x128xf32>
    %181 = arith.mulf %172, %153 : vector<8x128xf32>
    %182 = arith.mulf %166, %174 : vector<8x128xf32>
    %183 = arith.addf %181, %182 : vector<8x128xf32>
    %184 = math.tanh %183 : vector<8x128xf32>
    %185 = arith.mulf %180, %184 : vector<8x128xf32>
    %c6_i32 = arith.constant 6 : i32
    %186 = arith.index_cast %c6_i32 : i32 to index
    %c0_42 = arith.constant 0 : index
    %c0_43 = arith.constant 0 : index
    %187 = vector.load %arg2[%186, %c0_42, %c0_43] : memref<8x8x512xf32, #tpu.memory_space<vmem>>, vector<1x8x512xf32>
    %188 = vector.shape_cast %187 : vector<1x8x512xf32> to vector<8x512xf32>
    %cst_44 = arith.constant dense<0.000000e+00> : vector<8x512xf32>
    %189 = tpu.matmul %185, %3, %cst_44 {dimension_numbers = #tpu.dot_dimension_numbers<[1], [0], [0], [1], [0, 0, 1, 1], [], []>} : vector<8x128xf32>, vector<128x512xf32>, vector<8x512xf32> -> vector<8x512xf32>
    %190 = arith.addf %188, %189 : vector<8x512xf32>
    %191 = vector.extract_strided_slice %190 {offsets = [0, 0], sizes = [8, 128], strides = [1, 1]} : vector<8x512xf32> to vector<8x128xf32>
    %192 = arith.negf %191 : vector<8x128xf32>
    %193 = math.exp %192 : vector<8x128xf32>
    %cst_45 = arith.constant 1.000000e+00 : f32
    %194 = vector.broadcast %cst_45 : f32 to vector<8x128xf32>
    %195 = arith.addf %194, %193 : vector<8x128xf32>
    %196 = arith.divf %194, %195 : vector<8x128xf32>
    %197 = vector.extract_strided_slice %190 {offsets = [0, 128], sizes = [8, 128], strides = [1, 1]} : vector<8x512xf32> to vector<8x128xf32>
    %198 = arith.negf %197 : vector<8x128xf32>
    %199 = math.exp %198 : vector<8x128xf32>
    %cst_46 = arith.constant 1.000000e+00 : f32
    %200 = vector.broadcast %cst_46 : f32 to vector<8x128xf32>
    %201 = arith.addf %200, %199 : vector<8x128xf32>
    %202 = arith.divf %200, %201 : vector<8x128xf32>
    %203 = vector.extract_strided_slice %190 {offsets = [0, 256], sizes = [8, 128], strides = [1, 1]} : vector<8x512xf32> to vector<8x128xf32>
    %204 = math.tanh %203 : vector<8x128xf32>
    %205 = vector.extract_strided_slice %190 {offsets = [0, 384], sizes = [8, 128], strides = [1, 1]} : vector<8x512xf32> to vector<8x128xf32>
    %206 = arith.negf %205 : vector<8x128xf32>
    %207 = math.exp %206 : vector<8x128xf32>
    %cst_47 = arith.constant 1.000000e+00 : f32
    %208 = vector.broadcast %cst_47 : f32 to vector<8x128xf32>
    %209 = arith.addf %208, %207 : vector<8x128xf32>
    %210 = arith.divf %208, %209 : vector<8x128xf32>
    %211 = arith.mulf %202, %183 : vector<8x128xf32>
    %212 = arith.mulf %196, %204 : vector<8x128xf32>
    %213 = arith.addf %211, %212 : vector<8x128xf32>
    %214 = math.tanh %213 : vector<8x128xf32>
    %215 = arith.mulf %210, %214 : vector<8x128xf32>
    %c7_i32 = arith.constant 7 : i32
    %216 = arith.index_cast %c7_i32 : i32 to index
    %c0_48 = arith.constant 0 : index
    %c0_49 = arith.constant 0 : index
    %217 = vector.load %arg2[%216, %c0_48, %c0_49] : memref<8x8x512xf32, #tpu.memory_space<vmem>>, vector<1x8x512xf32>
    %218 = vector.shape_cast %217 : vector<1x8x512xf32> to vector<8x512xf32>
    %cst_50 = arith.constant dense<0.000000e+00> : vector<8x512xf32>
    %219 = tpu.matmul %215, %3, %cst_50 {dimension_numbers = #tpu.dot_dimension_numbers<[1], [0], [0], [1], [0, 0, 1, 1], [], []>} : vector<8x128xf32>, vector<128x512xf32>, vector<8x512xf32> -> vector<8x512xf32>
    %220 = arith.addf %218, %219 : vector<8x512xf32>
    %221 = vector.extract_strided_slice %220 {offsets = [0, 0], sizes = [8, 128], strides = [1, 1]} : vector<8x512xf32> to vector<8x128xf32>
    %222 = arith.negf %221 : vector<8x128xf32>
    %223 = math.exp %222 : vector<8x128xf32>
    %cst_51 = arith.constant 1.000000e+00 : f32
    %224 = vector.broadcast %cst_51 : f32 to vector<8x128xf32>
    %225 = arith.addf %224, %223 : vector<8x128xf32>
    %226 = arith.divf %224, %225 : vector<8x128xf32>
    %227 = vector.extract_strided_slice %220 {offsets = [0, 128], sizes = [8, 128], strides = [1, 1]} : vector<8x512xf32> to vector<8x128xf32>
    %228 = arith.negf %227 : vector<8x128xf32>
    %229 = math.exp %228 : vector<8x128xf32>
    %cst_52 = arith.constant 1.000000e+00 : f32
    %230 = vector.broadcast %cst_52 : f32 to vector<8x128xf32>
    %231 = arith.addf %230, %229 : vector<8x128xf32>
    %232 = arith.divf %230, %231 : vector<8x128xf32>
    %233 = vector.extract_strided_slice %220 {offsets = [0, 256], sizes = [8, 128], strides = [1, 1]} : vector<8x512xf32> to vector<8x128xf32>
    %234 = math.tanh %233 : vector<8x128xf32>
    %235 = vector.extract_strided_slice %220 {offsets = [0, 384], sizes = [8, 128], strides = [1, 1]} : vector<8x512xf32> to vector<8x128xf32>
    %236 = arith.negf %235 : vector<8x128xf32>
    %237 = math.exp %236 : vector<8x128xf32>
    %cst_53 = arith.constant 1.000000e+00 : f32
    %238 = vector.broadcast %cst_53 : f32 to vector<8x128xf32>
    %239 = arith.addf %238, %237 : vector<8x128xf32>
    %240 = arith.divf %238, %239 : vector<8x128xf32>
    %241 = arith.mulf %232, %213 : vector<8x128xf32>
    %242 = arith.mulf %226, %234 : vector<8x128xf32>
    %243 = arith.addf %241, %242 : vector<8x128xf32>
    %244 = math.tanh %243 : vector<8x128xf32>
    %245 = arith.mulf %240, %244 : vector<8x128xf32>
    %c8_i32 = arith.constant 8 : i32
    %c0_54 = arith.constant 0 : index
    %c0_55 = arith.constant 0 : index
    %246 = vector.load %arg5[%c0_54, %c0_55] : memref<8x128xf32, #tpu.memory_space<vmem>>, vector<8x128xf32>
    tpu.vector_store %arg5[%c0_54, %c0_55], %245 {strides = array<i32>} : memref<8x128xf32, #tpu.memory_space<vmem>>, vector<8x128xf32>,
    %c0_56 = arith.constant 0 : index
    %c0_57 = arith.constant 0 : index
    %247 = vector.load %arg6[%c0_56, %c0_57] : memref<8x128xf32, #tpu.memory_space<vmem>>, vector<8x128xf32>
    tpu.vector_store %arg6[%c0_56, %c0_57], %243 {strides = array<i32>} : memref<8x128xf32, #tpu.memory_space<vmem>>, vector<8x128xf32>,
    %c0_i32_58 = arith.constant 0 : i32
    %248 = arith.cmpi eq, %arg1, %c0_i32_58 : i32
    %249 = arith.extui %248 : i1 to i32
    %c0_i32_59 = arith.constant 0 : i32
    %250 = arith.cmpi ne, %249, %c0_i32_59 : i32
    scf.if %250 {
      %c0_60 = arith.constant 0 : index
      %c0_61 = arith.constant 0 : index
      %251 = vector.load %arg4[%c0_60, %c0_61] : memref<8x128xf32, #tpu.memory_space<vmem>>, vector<8x128xf32>
      tpu.vector_store %arg4[%c0_60, %c0_61], %245 {strides = array<i32>} : memref<8x128xf32, #tpu.memory_space<vmem>>, vector<8x128xf32>,
    } else {
    }
    return
  }
  func.func @transform_0(%arg0: i32, %arg1: i32) -> (i32, i32, i32) {
    %c0_i32 = arith.constant 0 : i32
    %c0_i32_0 = arith.constant 0 : i32
    return %arg1, %arg0, %c0_i32 : i32, i32, i32
  }
  func.func @transform_1(%arg0: i32, %arg1: i32) -> (i32, i32) {
    %c0_i32 = arith.constant 0 : i32
    %c0_i32_0 = arith.constant 0 : i32
    %c0_i32_1 = arith.constant 0 : i32
    return %c0_i32, %c0_i32_0 : i32, i32
  }
  func.func @transform_2(%arg0: i32, %arg1: i32) -> (i32, i32) {
    %c0_i32 = arith.constant 0 : i32
    %c0_i32_0 = arith.constant 0 : i32
    return %arg0, %c0_i32 : i32, i32
  }
}

</mosaic_0001>

<llo_original>
// kernel: tpu_custom_call.1
$region0: #{tpu_custom_call.1}
  #allocation0 [shape = 'u32[]', space=smem, size = 0x4, offset = 0x4, fixed_abs, tag = 'smem constant byte address 0x4 - core index']
  #allocation1 [shape = 'u32[144,128]{1,0:T(1,128)}', space=vmem, size = 0x12000, scoped, tag = 'internal scratch']
  #allocation2 [shape = 'f32[8,128]{1,0:T(8,128)}', space=vmem, size = 0x1000, scoped, tag = 'scratch operand']
  #allocation3 [shape = 'f32[8,128]{1,0:T(8,128)}', space=vmem, size = 0x1000, scoped, tag = 'scratch operand']
  %s0 = inlined_call_operand.hbm [shape: f32[8,8,512], index: 0, kind: input, shape index: {}]
  %s1 = inlined_call_operand.hbm [shape: f32[128,512], index: 1, kind: input, shape index: {}]
  %s2 = inlined_call_operand.hbm [shape: f32[8,128], index: 2, kind: output, shape index: {}]
  %s3 = sld [smem:[#allocation0]]
  $region34: #{tpu_custom_call.1} parent=0
    _
  %s5 = ssub.s32 1, %s3
  %s6 = scalar_select 0, %s5, %s3
  $region1: #{tpu_custom_call.1} parent=0
    #allocation4 [shape = 'u8[131072]{0}', space=vmem, size = 0x20000, scoped, tag = 'input window, operand 0, single buffered']
    #allocation5 [shape = 's32[1]{0}', space=sflag, size = 0x4, scoped, tag = 'scoped memory for tpu_custom_call.1']
    #allocation6 [shape = 's32[1]{0}', space=sflag, size = 0x4, scoped, tag = 'scoped memory for tpu_custom_call.1']
    #allocation7 [shape = 'u8[262144]{0}', space=vmem, size = 0x40000, scoped, tag = 'input window, operand 1, single buffered']
    #allocation8 [shape = 's32[1]{0}', space=sflag, size = 0x4, scoped, tag = 'scoped memory for tpu_custom_call.1']
    #allocation9 [shape = 'u8[4096]{0}', space=vmem, size = 0x1000, scoped, tag = 'output window, operand 0, single buffered']
    %7 = vsyncpa [#allocation5], 0
    %8 = vsyncpa [#allocation8], 0
    %9 = vsyncpa [#allocation6], 0
    // Predicated region
    $region2: #{tpu_custom_call.1} parent=1 // pred_check
      _
    $region3: #{tpu_custom_call.1} parent=1 // pred_check_branch
      %11 = sbr.rel (0) target = $region5
    $region4: #{tpu_custom_call.1} parent=1 // pred_region
      %s13 = ssub.s32 4096, 4096
      %14 = vsyncadd [#allocation5], %s13
      %s15 = sshll.u32 [#allocation4], 4
      %s16 = int_to_ptr.vmem [resolvable:$true] %s15
      %21 = dma.hbm_to_vmem [thread:$0]  %s0, 4096, %s16, [#allocation5], 512, 512, 32
    $region5: #{tpu_custom_call.1} parent=1 // pred_fallthru
      _
    // Predicated region
    $region6: #{tpu_custom_call.1} parent=1 // pred_check
      _
    $region7: #{tpu_custom_call.1} parent=1 // pred_check_branch
      %23 = sbr.rel (0) target = $region9
    $region8: #{tpu_custom_call.1} parent=1 // pred_region
      %s25 = ssub.s32 8192, 8192
      %26 = vsyncadd [#allocation8], %s25
      %s27 = sshll.u32 [#allocation7], 4
      %s28 = int_to_ptr.vmem [resolvable:$true] %s27
      %33 = dma.hbm_to_vmem [thread:$0]  %s1, 8192, %s28, [#allocation8], 512, 512, 32
    $region9: #{tpu_custom_call.1} parent=1 // pred_fallthru
      _
    // Predicated region
    $region10: #{tpu_custom_call.1} parent=1 // pred_check
      _
    $region11: #{tpu_custom_call.1} parent=1 // pred_check_branch
      %35 = sbr.rel (0) target = $region13
    $region12: #{tpu_custom_call.1} parent=1 // pred_region
      %36 = dma.done [#allocation5], 4096
    $region13: #{tpu_custom_call.1} parent=1 // pred_fallthru
      _
    // Predicated region
    $region14: #{tpu_custom_call.1} parent=1 // pred_check
      _
    $region15: #{tpu_custom_call.1} parent=1 // pred_check_branch
      %38 = sbr.rel (0) target = $region17
    $region16: #{tpu_custom_call.1} parent=1 // pred_region
      %39 = dma.done [#allocation8], 8192
    $region17: #{tpu_custom_call.1} parent=1 // pred_fallthru
      _
    %p40 = scmp.eq.s32.totalorder 0, 0
    // Predicated region
    $region18: #{tpu_custom_call.1} parent=1 // pred_check
      %p41 = pneg %p40
    $region19: #{tpu_custom_call.1} parent=1 // pred_check_branch
      %43 = sbr.rel (%p41) target = $region21
    $region20: #{tpu_custom_call.1} parent=1 // pred_region
      %44 = vst [vmem:[#allocation2] sm:$0xff] 0.0
      %45 = vst [vmem:[#allocation3] sm:$0xff] 0.0
    $region21: #{tpu_custom_call.1} parent=1 // pred_fallthru
      _
    %v46 = vld [vmem:[#allocation7] sm:$0xff]
    %v47 = vld [vmem:[#allocation7 + $0x8] sm:$0xff]
    %v48 = vld [vmem:[#allocation7 + $0x10] sm:$0xff]
    %v49 = vld [vmem:[#allocation7 + $0x18] sm:$0xff]
    %v50 = vld [vmem:[#allocation7 + $0x20] sm:$0xff]
    %v51 = vld [vmem:[#allocation7 + $0x28] sm:$0xff]
    %v52 = vld [vmem:[#allocation7 + $0x30] sm:$0xff]
    %v53 = vld [vmem:[#allocation7 + $0x38] sm:$0xff]
    %v54 = vld [vmem:[#allocation7 + $0x40] sm:$0xff]
    %v55 = vld [vmem:[#allocation7 + $0x48] sm:$0xff]
    %v56 = vld [vmem:[#allocation7 + $0x50] sm:$0xff]
    %v57 = vld [vmem:[#allocation7 + $0x58] sm:$0xff]
    %v58 = vld [vmem:[#allocation7 + $0x60] sm:$0xff]
    %v59 = vld [vmem:[#allocation7 + $0x68] sm:$0xff]
    %v60 = vld [vmem:[#allocation7 + $0x70] sm:$0xff]
    %v61 = vld [vmem:[#allocation7 + $0x78] sm:$0xff]
    %v62 = vld [vmem:[#allocation7 + $0x80] sm:$0xff]
    %v63 = vld [vmem:[#allocation7 + $0x88] sm:$0xff]
    %v64 = vld [vmem:[#allocation7 + $0x90] sm:$0xff]
    %v65 = vld [vmem:[#allocation7 + $0x98] sm:$0xff]
    %v66 = vld [vmem:[#allocation7 + $0xa0] sm:$0xff]
    %v67 = vld [vmem:[#allocation7 + $0xa8] sm:$0xff]
    %v68 = vld [vmem:[#allocation7 + $0xb0] sm:$0xff]
    %v69 = vld [vmem:[#allocation7 + $0xb8] sm:$0xff]
    %v70 = vld [vmem:[#allocation7 + $0xc0] sm:$0xff]
    %v71 = vld [vmem:[#allocation7 + $0xc8] sm:$0xff]
    %v72 = vld [vmem:[#allocation7 + $0xd0] sm:$0xff]
    %v73 = vld [vmem:[#allocation7 + $0xd8] sm:$0xff]
    %v74 = vld [vmem:[#allocation7 + $0xe0] sm:$0xff]
    %v75 = vld [vmem:[#allocation7 + $0xe8] sm:$0xff]
    %v76 = vld [vmem:[#allocation7 + $0xf0] sm:$0xff]
    %v77 = vld [vmem:[#allocation7 + $0xf8] sm:$0xff]
    %v78 = vld [vmem:[#allocation7 + $0x100] sm:$0xff]
    %v79 = vld [vmem:[#allocation7 + $0x108] sm:$0xff]
    %v80 = vld [vmem:[#allocation7 + $0x110] sm:$0xff]
    %v81 = vld [vmem:[#allocation7 + $0x118] sm:$0xff]
    %v82 = vld [vmem:[#allocation7 + $0x120] sm:$0xff]
    %v83 = vld [vmem:[#allocation7 + $0x128] sm:$0xff]
    %v84 = vld [vmem:[#allocation7 + $0x130] sm:$0xff]
    %v85 = vld [vmem:[#allocation7 + $0x138] sm:$0xff]
    %v86 = vld [vmem:[#allocation7 + $0x140] sm:$0xff]
    %v87 = vld [vmem:[#allocation7 + $0x148] sm:$0xff]
    %v88 = vld [vmem:[#allocation7 + $0x150] sm:$0xff]
    %v89 = vld [vmem:[#allocation7 + $0x158] sm:$0xff]
    %v90 = vld [vmem:[#allocation7 + $0x160] sm:$0xff]
    %v91 = vld [vmem:[#allocation7 + $0x168] sm:$0xff]
    %v92 = vld [vmem:[#allocation7 + $0x170] sm:$0xff]
    %v93 = vld [vmem:[#allocation7 + $0x178] sm:$0xff]
    %v94 = vld [vmem:[#allocation7 + $0x180] sm:$0xff]
    %v95 = vld [vmem:[#allocation7 + $0x188] sm:$0xff]
    %v96 = vld [vmem:[#allocation7 + $0x190] sm:$0xff]
    %v97 = vld [vmem:[#allocation7 + $0x198] sm:$0xff]
    %v98 = vld [vmem:[#allocation7 + $0x1a0] sm:$0xff]
    %v99 = vld [vmem:[#allocation7 + $0x1a8] sm:$0xff]
    %v100 = vld [vmem:[#allocation7 + $0x1b0] sm:$0xff]
    %v101 = vld [vmem:[#allocation7 + $0x1b8] sm:$0xff]
    %v102 = vld [vmem:[#allocation7 + $0x1c0] sm:$0xff]
    %v103 = vld [vmem:[#allocation7 + $0x1c8] sm:$0xff]
    %v104 = vld [vmem:[#allocation7 + $0x1d0] sm:$0xff]
    %v105 = vld [vmem:[#allocation7 + $0x1d8] sm:$0xff]
    %v106 = vld [vmem:[#allocation7 + $0x1e0] sm:$0xff]
    %v107 = vld [vmem:[#allocation7 + $0x1e8] sm:$0xff]
    %v108 = vld [vmem:[#allocation7 + $0x1f0] sm:$0xff]
    %v109 = vld [vmem:[#allocation7 + $0x1f8] sm:$0xff]
    %v110 = vld [vmem:[#allocation2] sm:$0xff]
    %v111 = vld [vmem:[#allocation3] sm:$0xff]
    %v112 = vld [vmem:[#allocation4] sm:$0xff]
    %v113 = vld [vmem:[#allocation4 + $0x8] sm:$0xff]
    %v114 = vld [vmem:[#allocation4 + $0x10] sm:$0xff]
    %v115 = vld [vmem:[#allocation4 + $0x18] sm:$0xff]
    %116 = vmatprep.subr.mxu0 %v107
    %117 = vmatpush1.msra.mxu0 %v106
    %118 = vmatprep.subr.mxu0 %v103
    %119 = vmatpush1.msra.mxu0 %v102
    %120 = vmatprep.subr.mxu0 %v99
    %121 = vmatpush1.msra.mxu0 %v98
    %122 = vmatprep.subr.mxu0 %v95
    %123 = vmatpush1.msra.mxu0 %v94
    %124 = vmatprep.subr.mxu0 %v91
    %125 = vmatpush1.msra.mxu0 %v90
    %126 = vmatprep.subr.mxu0 %v87
    %127 = vmatpush1.msra.mxu0 %v86
    %128 = vmatprep.subr.mxu0 %v83
    %129 = vmatpush1.msra.mxu0 %v82
    %130 = vmatprep.subr.mxu0 %v79
    %131 = vmatpush1.msra.mxu0 %v78
    %132 = vmatprep.subr.mxu0 %v75
    %133 = vmatpush1.msra.mxu0 %v74
    %134 = vmatprep.subr.mxu0 %v71
    %135 = vmatpush1.msra.mxu0 %v70
    %136 = vmatprep.subr.mxu0 %v67
    %137 = vmatpush1.msra.mxu0 %v66
    %138 = vmatprep.subr.mxu0 %v63
    %139 = vmatpush1.msra.mxu0 %v62
    %140 = vmatprep.subr.mxu0 %v59
    %141 = vmatpush1.msra.mxu0 %v58
    %142 = vmatprep.subr.mxu0 %v55
    %143 = vmatpush1.msra.mxu0 %v54
    %144 = vmatprep.subr.mxu0 %v51
    %145 = vmatpush1.msra.mxu0 %v50
    %146 = vmatprep.subr.mxu0 %v47
    %147 = vmatpush1.msra.mxu0 %v46
    %148 = vmatprep.subr.mxu0 0.0
    %149 = vmatpush2.msra.mxu0 0.0
    %150 = vmatprep.subr.mxu0 0.0
    %151 = vmatpush2.msra.mxu0 0.0
    %152 = vmatprep.subr.mxu0 0.0
    %153 = vmatpush2.msra.mxu0 0.0
    %154 = vmatprep.subr.mxu0 0.0
    %155 = vmatpush2.msra.mxu0 0.0
    %156 = vmatprep.subr.mxu0 0.0
    %157 = vmatpush2.msra.mxu0 0.0
    %158 = vmatprep.subr.mxu0 0.0
    %159 = vmatpush2.msra.mxu0 0.0
    %160 = vmatprep.subr.mxu0 0.0
    %161 = vmatpush2.msra.mxu0 0.0
    %162 = vmatprep.subr.mxu0 0.0
    %163 = vmatpush2.msra.mxu0 0.0
    %164 = vmatprep.subr.mxu0 0.0
    %165 = vmatpush2.msra.mxu0 0.0
    %166 = vmatprep.subr.mxu0 0.0
    %167 = vmatpush2.msra.mxu0 0.0
    %168 = vmatprep.subr.mxu0 0.0
    %169 = vmatpush2.msra.mxu0 0.0
    %170 = vmatprep.subr.mxu0 0.0
    %171 = vmatpush2.msra.mxu0 0.0
    %172 = vmatprep.subr.mxu0 0.0
    %173 = vmatpush2.msra.mxu0 0.0
    %174 = vmatprep.subr.mxu0 0.0
    %175 = vmatpush2.msra.mxu0 0.0
    %176 = vmatprep.subr.mxu0 0.0
    %177 = vmatpush2.msra.mxu0 0.0
    %178 = vmatprep.subr.mxu0 0.0
    %179 = vmatpush2.msra.mxu0 0.0
    %180 = vmatprep.mubr.f32.mxu0 0.0
    %181 = vmatmul.mubr.f32.gmra.mxu0 %v110
    %v182 = vpop.f32.mrf.mxu0
    %v183 = vadd.f32 0.0, %v182
    %v184 = vpop.f32.mrf.mxu0
    %v185 = vadd.f32 0.0, %v184
    %186 = vdwg.mxu0
    %187 = vmatprep.subr.mxu0 %v109
    %188 = vmatpush1.msra.mxu0 %v108
    %189 = vmatprep.subr.mxu0 %v105
    %190 = vmatpush1.msra.mxu0 %v104
    %191 = vmatprep.subr.mxu0 %v101
    %192 = vmatpush1.msra.mxu0 %v100
    %193 = vmatprep.subr.mxu0 %v97
    %194 = vmatpush1.msra.mxu0 %v96
    %195 = vmatprep.subr.mxu0 %v93
    %196 = vmatpush1.msra.mxu0 %v92
    %197 = vmatprep.subr.mxu0 %v89
    %198 = vmatpush1.msra.mxu0 %v88
    %199 = vmatprep.subr.mxu0 %v85
    %200 = vmatpush1.msra.mxu0 %v84
    %201 = vmatprep.subr.mxu0 %v81
    %202 = vmatpush1.msra.mxu0 %v80
    %203 = vmatprep.subr.mxu0 %v77
    %204 = vmatpush1.msra.mxu0 %v76
    %205 = vmatprep.subr.mxu0 %v73
    %206 = vmatpush1.msra.mxu0 %v72
    %207 = vmatprep.subr.mxu0 %v69
    %208 = vmatpush1.msra.mxu0 %v68
    %209 = vmatprep.subr.mxu0 %v65
    %210 = vmatpush1.msra.mxu0 %v64
    %211 = vmatprep.subr.mxu0 %v61
    %212 = vmatpush1.msra.mxu0 %v60
    %213 = vmatprep.subr.mxu0 %v57
    %214 = vmatpush1.msra.mxu0 %v56
    %215 = vmatprep.subr.mxu0 %v53
    %216 = vmatpush1.msra.mxu0 %v52
    %217 = vmatprep.subr.mxu0 %v49
    %218 = vmatpush1.msra.mxu0 %v48
    %219 = vmatprep.subr.mxu0 0.0
    %220 = vmatpush2.msra.mxu0 0.0
    %221 = vmatprep.subr.mxu0 0.0
    %222 = vmatpush2.msra.mxu0 0.0
    %223 = vmatprep.subr.mxu0 0.0
    %224 = vmatpush2.msra.mxu0 0.0
    %225 = vmatprep.subr.mxu0 0.0
    %226 = vmatpush2.msra.mxu0 0.0
    %227 = vmatprep.subr.mxu0 0.0
    %228 = vmatpush2.msra.mxu0 0.0
    %229 = vmatprep.subr.mxu0 0.0
    %230 = vmatpush2.msra.mxu0 0.0
    %231 = vmatprep.subr.mxu0 0.0
    %232 = vmatpush2.msra.mxu0 0.0
    %233 = vmatprep.subr.mxu0 0.0
    %234 = vmatpush2.msra.mxu0 0.0
    %235 = vmatprep.subr.mxu0 0.0
    %236 = vmatpush2.msra.mxu0 0.0
    %237 = vmatprep.subr.mxu0 0.0
    %238 = vmatpush2.msra.mxu0 0.0
    %239 = vmatprep.subr.mxu0 0.0
    %240 = vmatpush2.msra.mxu0 0.0
    %241 = vmatprep.subr.mxu0 0.0
    %242 = vmatpush2.msra.mxu0 0.0
    %243 = vmatprep.subr.mxu0 0.0
    %244 = vmatpush2.msra.mxu0 0.0
    %245 = vmatprep.subr.mxu0 0.0
    %246 = vmatpush2.msra.mxu0 0.0
    %247 = vmatprep.subr.mxu0 0.0
    %248 = vmatpush2.msra.mxu0 0.0
    %249 = vmatprep.subr.mxu0 0.0
    %250 = vmatpush2.msra.mxu0 0.0
    %251 = vmatprep.mubr.f32.mxu0 0.0
    %252 = vmatmul.mubr.f32.gmra.mxu0 %v110
    %v253 = vpop.f32.mrf.mxu0
    %v254 = vadd.f32 0.0, %v253
    %v255 = vpop.f32.mrf.mxu0
    %v256 = vadd.f32 0.0, %v255
    %257 = vdwg.mxu0
    %v258 = vadd.f32 %v112, %v183
    %v259 = vadd.f32 %v113, %v185
    %v260 = vadd.f32 %v114, %v254
    %v261 = vadd.f32 %v115, %v256
    %v262 = vxor.u32 %v258, 2147483648
    %v263 = vmul.f32 %v262, 1.442695
    %v264 = vpow.pop %v263
    %v265 = vadd.f32 %v264, 1.0
    %v266 = vrcp.pop %v265
    %v267 = vmul.f32 1.0, %v266
    %v268 = vxor.u32 %v259, 2147483648
    %v269 = vmul.f32 %v268, 1.442695
    %v270 = vpow.pop %v269
    %v271 = vadd.f32 %v270, 1.0
    %v272 = vrcp.pop %v271
    %v273 = vmul.f32 1.0, %v272
    %v274 = vtanh.pop %v260
    %v275 = vxor.u32 %v261, 2147483648
    %v276 = vmul.f32 %v275, 1.442695
    %v277 = vpow.pop %v276
    %v278 = vadd.f32 %v277, 1.0
    %v279 = vrcp.pop %v278
    %v280 = vmul.f32 1.0, %v279
    %v281 = vmul.f32 %v273, %v111
    %v282 = vmul.f32 %v267, %v274
    %v283 = vadd.f32 %v281, %v282
    %v284 = vtanh.pop %v283
    %v285 = vmul.f32 %v280, %v284
    %s286 = scalar_lea.vmem [#allocation4], 32
    %v287 = vld [vmem:[%s286] sm:$0xff]
    %v288 = vld [vmem:[%s286 + $0x8] sm:$0xff]
    %v289 = vld [vmem:[%s286 + $0x10] sm:$0xff]
    %v290 = vld [vmem:[%s286 + $0x18] sm:$0xff]
    %291 = vmatprep.subr.mxu0 %v107
    %292 = vmatpush1.msra.mxu0 %v106
    %293 = vmatprep.subr.mxu0 %v103
    %294 = vmatpush1.msra.mxu0 %v102
    %295 = vmatprep.subr.mxu0 %v99
    %296 = vmatpush1.msra.mxu0 %v98
    %297 = vmatprep.subr.mxu0 %v95
    %298 = vmatpush1.msra.mxu0 %v94
    %299 = vmatprep.subr.mxu0 %v91
    %300 = vmatpush1.msra.mxu0 %v90
    %301 = vmatprep.subr.mxu0 %v87
    %302 = vmatpush1.msra.mxu0 %v86
    %303 = vmatprep.subr.mxu0 %v83
    %304 = vmatpush1.msra.mxu0 %v82
    %305 = vmatprep.subr.mxu0 %v79
    %306 = vmatpush1.msra.mxu0 %v78
    %307 = vmatprep.subr.mxu0 %v75
    %308 = vmatpush1.msra.mxu0 %v74
    %309 = vmatprep.subr.mxu0 %v71
    %310 = vmatpush1.msra.mxu0 %v70
    %311 = vmatprep.subr.mxu0 %v67
    %312 = vmatpush1.msra.mxu0 %v66
    %313 = vmatprep.subr.mxu0 %v63
    %314 = vmatpush1.msra.mxu0 %v62
    %315 = vmatprep.subr.mxu0 %v59
    %316 = vmatpush1.msra.mxu0 %v58
    %317 = vmatprep.subr.mxu0 %v55
    %318 = vmatpush1.msra.mxu0 %v54
    %319 = vmatprep.subr.mxu0 %v51
    %320 = vmatpush1.msra.mxu0 %v50
    %321 = vmatprep.subr.mxu0 %v47
    %322 = vmatpush1.msra.mxu0 %v46
    %323 = vmatprep.subr.mxu0 0.0
    %324 = vmatpush2.msra.mxu0 0.0
    %325 = vmatprep.subr.mxu0 0.0
    %326 = vmatpush2.msra.mxu0 0.0
    %327 = vmatprep.subr.mxu0 0.0
    %328 = vmatpush2.msra.mxu0 0.0
    %329 = vmatprep.subr.mxu0 0.0
    %330 = vmatpush2.msra.mxu0 0.0
    %331 = vmatprep.subr.mxu0 0.0
    %332 = vmatpush2.msra.mxu0 0.0
    %333 = vmatprep.subr.mxu0 0.0
    %334 = vmatpush2.msra.mxu0 0.0
    %335 = vmatprep.subr.mxu0 0.0
    %336 = vmatpush2.msra.mxu0 0.0
    %337 = vmatprep.subr.mxu0 0.0
    %338 = vmatpush2.msra.mxu0 0.0
    %339 = vmatprep.subr.mxu0 0.0
    %340 = vmatpush2.msra.mxu0 0.0
    %341 = vmatprep.subr.mxu0 0.0
    %342 = vmatpush2.msra.mxu0 0.0
    %343 = vmatprep.subr.mxu0 0.0
    %344 = vmatpush2.msra.mxu0 0.0
    %345 = vmatprep.subr.mxu0 0.0
    %346 = vmatpush2.msra.mxu0 0.0
    %347 = vmatprep.subr.mxu0 0.0
    %348 = vmatpush2.msra.mxu0 0.0
    %349 = vmatprep.subr.mxu0 0.0
    %350 = vmatpush2.msra.mxu0 0.0
    %351 = vmatprep.subr.mxu0 0.0
    %352 = vmatpush2.msra.mxu0 0.0
    %353 = vmatprep.subr.mxu0 0.0
    %354 = vmatpush2.msra.mxu0 0.0
    %355 = vmatprep.mubr.f32.mxu0 0.0
    %356 = vmatmul.mubr.f32.gmra.mxu0 %v285
    %v357 = vpop.f32.mrf.mxu0
    %v358 = vadd.f32 0.0, %v357
    %v359 = vpop.f32.mrf.mxu0
    %v360 = vadd.f32 0.0, %v359
    %361 = vdwg.mxu0
    %362 = vmatprep.subr.mxu0 %v109
    %363 = vmatpush1.msra.mxu0 %v108
    %364 = vmatprep.subr.mxu0 %v105
    %365 = vmatpush1.msra.mxu0 %v104
    %366 = vmatprep.subr.mxu0 %v101
    %367 = vmatpush1.msra.mxu0 %v100
    %368 = vmatprep.subr.mxu0 %v97
    %369 = vmatpush1.msra.mxu0 %v96
    %370 = vmatprep.subr.mxu0 %v93
    %371 = vmatpush1.msra.mxu0 %v92
    %372 = vmatprep.subr.mxu0 %v89
    %373 = vmatpush1.msra.mxu0 %v88
    %374 = vmatprep.subr.mxu0 %v85
    %375 = vmatpush1.msra.mxu0 %v84
    %376 = vmatprep.subr.mxu0 %v81
    %377 = vmatpush1.msra.mxu0 %v80
    %378 = vmatprep.subr.mxu0 %v77
    %379 = vmatpush1.msra.mxu0 %v76
    %380 = vmatprep.subr.mxu0 %v73
    %381 = vmatpush1.msra.mxu0 %v72
    %382 = vmatprep.subr.mxu0 %v69
    %383 = vmatpush1.msra.mxu0 %v68
    %384 = vmatprep.subr.mxu0 %v65
    %385 = vmatpush1.msra.mxu0 %v64
    %386 = vmatprep.subr.mxu0 %v61
    %387 = vmatpush1.msra.mxu0 %v60
    %388 = vmatprep.subr.mxu0 %v57
    %389 = vmatpush1.msra.mxu0 %v56
    %390 = vmatprep.subr.mxu0 %v53
    %391 = vmatpush1.msra.mxu0 %v52
    %392 = vmatprep.subr.mxu0 %v49
    %393 = vmatpush1.msra.mxu0 %v48
    %394 = vmatprep.subr.mxu0 0.0
    %395 = vmatpush2.msra.mxu0 0.0
    %396 = vmatprep.subr.mxu0 0.0
    %397 = vmatpush2.msra.mxu0 0.0
    %398 = vmatprep.subr.mxu0 0.0
    %399 = vmatpush2.msra.mxu0 0.0
    %400 = vmatprep.subr.mxu0 0.0
    %401 = vmatpush2.msra.mxu0 0.0
    %402 = vmatprep.subr.mxu0 0.0
    %403 = vmatpush2.msra.mxu0 0.0
    %404 = vmatprep.subr.mxu0 0.0
    %405 = vmatpush2.msra.mxu0 0.0
    %406 = vmatprep.subr.mxu0 0.0
    %407 = vmatpush2.msra.mxu0 0.0
    %408 = vmatprep.subr.mxu0 0.0
    %409 = vmatpush2.msra.mxu0 0.0
    %410 = vmatprep.subr.mxu0 0.0
    %411 = vmatpush2.msra.mxu0 0.0
    %412 = vmatprep.subr.mxu0 0.0
    %413 = vmatpush2.msra.mxu0 0.0
    %414 = vmatprep.subr.mxu0 0.0
    %415 = vmatpush2.msra.mxu0 0.0
    %416 = vmatprep.subr.mxu0 0.0
    %417 = vmatpush2.msra.mxu0 0.0
    %418 = vmatprep.subr.mxu0 0.0
    %419 = vmatpush2.msra.mxu0 0.0
    %420 = vmatprep.subr.mxu0 0.0
    %421 = vmatpush2.msra.mxu0 0.0
    %422 = vmatprep.subr.mxu0 0.0
    %423 = vmatpush2.msra.mxu0 0.0
    %424 = vmatprep.subr.mxu0 0.0
    %425 = vmatpush2.msra.mxu0 0.0
    %426 = vmatprep.mubr.f32.mxu0 0.0
    %427 = vmatmul.mubr.f32.gmra.mxu0 %v285
    %v428 = vpop.f32.mrf.mxu0
    %v429 = vadd.f32 0.0, %v428
    %v430 = vpop.f32.mrf.mxu0
    %v431 = vadd.f32 0.0, %v430
    %432 = vdwg.mxu0
    %v433 = vadd.f32 %v287, %v358
    %v434 = vadd.f32 %v288, %v360
    %v435 = vadd.f32 %v289, %v429
    %v436 = vadd.f32 %v290, %v431
    %v437 = vxor.u32 %v433, 2147483648
    %v438 = vmul.f32 %v437, 1.442695
    %v439 = vpow.pop %v438
    %v440 = vadd.f32 %v439, 1.0
    %v441 = vrcp.pop %v440
    %v442 = vmul.f32 1.0, %v441
    %v443 = vxor.u32 %v434, 2147483648
    %v444 = vmul.f32 %v443, 1.442695
    %v445 = vpow.pop %v444
    %v446 = vadd.f32 %v445, 1.0
    %v447 = vrcp.pop %v446
    %v448 = vmul.f32 1.0, %v447
    %v449 = vtanh.pop %v435
    %v450 = vxor.u32 %v436, 2147483648
    %v451 = vmul.f32 %v450, 1.442695
    %v452 = vpow.pop %v451
    %v453 = vadd.f32 %v452, 1.0
    %v454 = vrcp.pop %v453
    %v455 = vmul.f32 1.0, %v454
    %v456 = vmul.f32 %v448, %v283
    %v457 = vmul.f32 %v442, %v449
    %v458 = vadd.f32 %v456, %v457
    %v459 = vtanh.pop %v458
    %v460 = vmul.f32 %v455, %v459
    %s461 = scalar_lea.vmem [#allocation4], 64
    %v462 = vld [vmem:[%s461] sm:$0xff]
    %v463 = vld [vmem:[%s461 + $0x8] sm:$0xff]
    %v464 = vld [vmem:[%s461 + $0x10] sm:$0xff]
    %v465 = vld [vmem:[%s461 + $0x18] sm:$0xff]
    %466 = vmatprep.subr.mxu0 %v107
    %467 = vmatpush1.msra.mxu0 %v106
    %468 = vmatprep.subr.mxu0 %v103
    %469 = vmatpush1.msra.mxu0 %v102
    %470 = vmatprep.subr.mxu0 %v99
    %471 = vmatpush1.msra.mxu0 %v98
    %472 = vmatprep.subr.mxu0 %v95
    %473 = vmatpush1.msra.mxu0 %v94
    %474 = vmatprep.subr.mxu0 %v91
    %475 = vmatpush1.msra.mxu0 %v90
    %476 = vmatprep.subr.mxu0 %v87
    %477 = vmatpush1.msra.mxu0 %v86
    %478 = vmatprep.subr.mxu0 %v83
    %479 = vmatpush1.msra.mxu0 %v82
    %480 = vmatprep.subr.mxu0 %v79
    %481 = vmatpush1.msra.mxu0 %v78
    %482 = vmatprep.subr.mxu0 %v75
    %483 = vmatpush1.msra.mxu0 %v74
    %484 = vmatprep.subr.mxu0 %v71
    %485 = vmatpush1.msra.mxu0 %v70
    %486 = vmatprep.subr.mxu0 %v67
    %487 = vmatpush1.msra.mxu0 %v66
    %488 = vmatprep.subr.mxu0 %v63
    %489 = vmatpush1.msra.mxu0 %v62
    %490 = vmatprep.subr.mxu0 %v59
    %491 = vmatpush1.msra.mxu0 %v58
    %492 = vmatprep.subr.mxu0 %v55
    %493 = vmatpush1.msra.mxu0 %v54
    %494 = vmatprep.subr.mxu0 %v51
    %495 = vmatpush1.msra.mxu0 %v50
    %496 = vmatprep.subr.mxu0 %v47
    %497 = vmatpush1.msra.mxu0 %v46
    %498 = vmatprep.subr.mxu0 0.0
    %499 = vmatpush2.msra.mxu0 0.0
    %500 = vmatprep.subr.mxu0 0.0
    %501 = vmatpush2.msra.mxu0 0.0
    %502 = vmatprep.subr.mxu0 0.0
    %503 = vmatpush2.msra.mxu0 0.0
    %504 = vmatprep.subr.mxu0 0.0
    %505 = vmatpush2.msra.mxu0 0.0
    %506 = vmatprep.subr.mxu0 0.0
    %507 = vmatpush2.msra.mxu0 0.0
    %508 = vmatprep.subr.mxu0 0.0
    %509 = vmatpush2.msra.mxu0 0.0
    %510 = vmatprep.subr.mxu0 0.0
    %511 = vmatpush2.msra.mxu0 0.0
    %512 = vmatprep.subr.mxu0 0.0
    %513 = vmatpush2.msra.mxu0 0.0
    %514 = vmatprep.subr.mxu0 0.0
    %515 = vmatpush2.msra.mxu0 0.0
    %516 = vmatprep.subr.mxu0 0.0
    %517 = vmatpush2.msra.mxu0 0.0
    %518 = vmatprep.subr.mxu0 0.0
    %519 = vmatpush2.msra.mxu0 0.0
    %520 = vmatprep.subr.mxu0 0.0
    %521 = vmatpush2.msra.mxu0 0.0
    %522 = vmatprep.subr.mxu0 0.0
    %523 = vmatpush2.msra.mxu0 0.0
    %524 = vmatprep.subr.mxu0 0.0
    %525 = vmatpush2.msra.mxu0 0.0
    %526 = vmatprep.subr.mxu0 0.0
    %527 = vmatpush2.msra.mxu0 0.0
    %528 = vmatprep.subr.mxu0 0.0
    %529 = vmatpush2.msra.mxu0 0.0
    %530 = vmatprep.mubr.f32.mxu0 0.0
    %531 = vmatmul.mubr.f32.gmra.mxu0 %v460
    %v532 = vpop.f32.mrf.mxu0
    %v533 = vadd.f32 0.0, %v532
    %v534 = vpop.f32.mrf.mxu0
    %v535 = vadd.f32 0.0, %v534
    %536 = vdwg.mxu0
    %537 = vmatprep.subr.mxu0 %v109
    %538 = vmatpush1.msra.mxu0 %v108
    %539 = vmatprep.subr.mxu0 %v105
    %540 = vmatpush1.msra.mxu0 %v104
    %541 = vmatprep.subr.mxu0 %v101
    %542 = vmatpush1.msra.mxu0 %v100
    %543 = vmatprep.subr.mxu0 %v97
    %544 = vmatpush1.msra.mxu0 %v96
    %545 = vmatprep.subr.mxu0 %v93
    %546 = vmatpush1.msra.mxu0 %v92
    %547 = vmatprep.subr.mxu0 %v89
    %548 = vmatpush1.msra.mxu0 %v88
    %549 = vmatprep.subr.mxu0 %v85
    %550 = vmatpush1.msra.mxu0 %v84
    %551 = vmatprep.subr.mxu0 %v81
    %552 = vmatpush1.msra.mxu0 %v80
    %553 = vmatprep.subr.mxu0 %v77
    %554 = vmatpush1.msra.mxu0 %v76
    %555 = vmatprep.subr.mxu0 %v73
    %556 = vmatpush1.msra.mxu0 %v72
    %557 = vmatprep.subr.mxu0 %v69
    %558 = vmatpush1.msra.mxu0 %v68
    %559 = vmatprep.subr.mxu0 %v65
    %560 = vmatpush1.msra.mxu0 %v64
    %561 = vmatprep.subr.mxu0 %v61
    %562 = vmatpush1.msra.mxu0 %v60
    %563 = vmatprep.subr.mxu0 %v57
    %564 = vmatpush1.msra.mxu0 %v56
    %565 = vmatprep.subr.mxu0 %v53
    %566 = vmatpush1.msra.mxu0 %v52
    %567 = vmatprep.subr.mxu0 %v49
    %568 = vmatpush1.msra.mxu0 %v48
    %569 = vmatprep.subr.mxu0 0.0
    %570 = vmatpush2.msra.mxu0 0.0
    %571 = vmatprep.subr.mxu0 0.0
    %572 = vmatpush2.msra.mxu0 0.0
    %573 = vmatprep.subr.mxu0 0.0
    %574 = vmatpush2.msra.mxu0 0.0
    %575 = vmatprep.subr.mxu0 0.0
    %576 = vmatpush2.msra.mxu0 0.0
    %577 = vmatprep.subr.mxu0 0.0
    %578 = vmatpush2.msra.mxu0 0.0
    %579 = vmatprep.subr.mxu0 0.0
    %580 = vmatpush2.msra.mxu0 0.0
    %581 = vmatprep.subr.mxu0 0.0
    %582 = vmatpush2.msra.mxu0 0.0
    %583 = vmatprep.subr.mxu0 0.0
    %584 = vmatpush2.msra.mxu0 0.0
    %585 = vmatprep.subr.mxu0 0.0
    %586 = vmatpush2.msra.mxu0 0.0
    %587 = vmatprep.subr.mxu0 0.0
    %588 = vmatpush2.msra.mxu0 0.0
    %589 = vmatprep.subr.mxu0 0.0
    %590 = vmatpush2.msra.mxu0 0.0
    %591 = vmatprep.subr.mxu0 0.0
    %592 = vmatpush2.msra.mxu0 0.0
    %593 = vmatprep.subr.mxu0 0.0
    %594 = vmatpush2.msra.mxu0 0.0
    %595 = vmatprep.subr.mxu0 0.0
    %596 = vmatpush2.msra.mxu0 0.0
    %597 = vmatprep.subr.mxu0 0.0
    %598 = vmatpush2.msra.mxu0 0.0
    %599 = vmatprep.subr.mxu0 0.0
    %600 = vmatpush2.msra.mxu0 0.0
    %601 = vmatprep.mubr.f32.mxu0 0.0
    %602 = vmatmul.mubr.f32.gmra.mxu0 %v460
    %v603 = vpop.f32.mrf.mxu0
    %v604 = vadd.f32 0.0, %v603
    %v605 = vpop.f32.mrf.mxu0
    %v606 = vadd.f32 0.0, %v605
    %607 = vdwg.mxu0
    %v608 = vadd.f32 %v462, %v533
    %v609 = vadd.f32 %v463, %v535
    %v610 = vadd.f32 %v464, %v604
    %v611 = vadd.f32 %v465, %v606
    %v612 = vxor.u32 %v608, 2147483648
    %v613 = vmul.f32 %v612, 1.442695
    %v614 = vpow.pop %v613
    %v615 = vadd.f32 %v614, 1.0
    %v616 = vrcp.pop %v615
    %v617 = vmul.f32 1.0, %v616
    %v618 = vxor.u32 %v609, 2147483648
    %v619 = vmul.f32 %v618, 1.442695
    %v620 = vpow.pop %v619
    %v621 = vadd.f32 %v620, 1.0
    %v622 = vrcp.pop %v621
    %v623 = vmul.f32 1.0, %v622
    %v624 = vtanh.pop %v610
    %v625 = vxor.u32 %v611, 2147483648
    %v626 = vmul.f32 %v625, 1.442695
    %v627 = vpow.pop %v626
    %v628 = vadd.f32 %v627, 1.0
    %v629 = vrcp.pop %v628
    %v630 = vmul.f32 1.0, %v629
    %v631 = vmul.f32 %v623, %v458
    %v632 = vmul.f32 %v617, %v624
    %v633 = vadd.f32 %v631, %v632
    %v634 = vtanh.pop %v633
    %v635 = vmul.f32 %v630, %v634
    %s636 = scalar_lea.vmem [#allocation4], 96
    %v637 = vld [vmem:[%s636] sm:$0xff]
    %v638 = vld [vmem:[%s636 + $0x8] sm:$0xff]
    %v639 = vld [vmem:[%s636 + $0x10] sm:$0xff]
    %v640 = vld [vmem:[%s636 + $0x18] sm:$0xff]
    %641 = vmatprep.subr.mxu0 %v107
    %642 = vmatpush1.msra.mxu0 %v106
    %643 = vmatprep.subr.mxu0 %v103
    %644 = vmatpush1.msra.mxu0 %v102
    %645 = vmatprep.subr.mxu0 %v99
    %646 = vmatpush1.msra.mxu0 %v98
    %647 = vmatprep.subr.mxu0 %v95
    %648 = vmatpush1.msra.mxu0 %v94
    %649 = vmatprep.subr.mxu0 %v91
    %650 = vmatpush1.msra.mxu0 %v90
    %651 = vmatprep.subr.mxu0 %v87
    %652 = vmatpush1.msra.mxu0 %v86
    %653 = vmatprep.subr.mxu0 %v83
    %654 = vmatpush1.msra.mxu0 %v82
    %655 = vmatprep.subr.mxu0 %v79
    %656 = vmatpush1.msra.mxu0 %v78
    %657 = vmatprep.subr.mxu0 %v75
    %658 = vmatpush1.msra.mxu0 %v74
    %659 = vmatprep.subr.mxu0 %v71
    %660 = vmatpush1.msra.mxu0 %v70
    %661 = vmatprep.subr.mxu0 %v67
    %662 = vmatpush1.msra.mxu0 %v66
    %663 = vmatprep.subr.mxu0 %v63
    %664 = vmatpush1.msra.mxu0 %v62
    %665 = vmatprep.subr.mxu0 %v59
    %666 = vmatpush1.msra.mxu0 %v58
    %667 = vmatprep.subr.mxu0 %v55
    %668 = vmatpush1.msra.mxu0 %v54
    %669 = vmatprep.subr.mxu0 %v51
    %670 = vmatpush1.msra.mxu0 %v50
    %671 = vmatprep.subr.mxu0 %v47
    %672 = vmatpush1.msra.mxu0 %v46
    %673 = vmatprep.subr.mxu0 0.0
    %674 = vmatpush2.msra.mxu0 0.0
    %675 = vmatprep.subr.mxu0 0.0
    %676 = vmatpush2.msra.mxu0 0.0
    %677 = vmatprep.subr.mxu0 0.0
    %678 = vmatpush2.msra.mxu0 0.0
    %679 = vmatprep.subr.mxu0 0.0
    %680 = vmatpush2.msra.mxu0 0.0
    %681 = vmatprep.subr.mxu0 0.0
    %682 = vmatpush2.msra.mxu0 0.0
    %683 = vmatprep.subr.mxu0 0.0
    %684 = vmatpush2.msra.mxu0 0.0
    %685 = vmatprep.subr.mxu0 0.0
    %686 = vmatpush2.msra.mxu0 0.0
    %687 = vmatprep.subr.mxu0 0.0
    %688 = vmatpush2.msra.mxu0 0.0
    %689 = vmatprep.subr.mxu0 0.0
    %690 = vmatpush2.msra.mxu0 0.0
    %691 = vmatprep.subr.mxu0 0.0
    %692 = vmatpush2.msra.mxu0 0.0
    %693 = vmatprep.subr.mxu0 0.0
    %694 = vmatpush2.msra.mxu0 0.0
    %695 = vmatprep.subr.mxu0 0.0
    %696 = vmatpush2.msra.mxu0 0.0
    %697 = vmatprep.subr.mxu0 0.0
    %698 = vmatpush2.msra.mxu0 0.0
    %699 = vmatprep.subr.mxu0 0.0
    %700 = vmatpush2.msra.mxu0 0.0
    %701 = vmatprep.subr.mxu0 0.0
    %702 = vmatpush2.msra.mxu0 0.0
    %703 = vmatprep.subr.mxu0 0.0
    %704 = vmatpush2.msra.mxu0 0.0
    %705 = vmatprep.mubr.f32.mxu0 0.0
    %706 = vmatmul.mubr.f32.gmra.mxu0 %v635
    %v707 = vpop.f32.mrf.mxu0
    %v708 = vadd.f32 0.0, %v707
    %v709 = vpop.f32.mrf.mxu0
    %v710 = vadd.f32 0.0, %v709
    %711 = vdwg.mxu0
    %712 = vmatprep.subr.mxu0 %v109
    %713 = vmatpush1.msra.mxu0 %v108
    %714 = vmatprep.subr.mxu0 %v105
    %715 = vmatpush1.msra.mxu0 %v104
    %716 = vmatprep.subr.mxu0 %v101
    %717 = vmatpush1.msra.mxu0 %v100
    %718 = vmatprep.subr.mxu0 %v97
    %719 = vmatpush1.msra.mxu0 %v96
    %720 = vmatprep.subr.mxu0 %v93
    %721 = vmatpush1.msra.mxu0 %v92
    %722 = vmatprep.subr.mxu0 %v89
    %723 = vmatpush1.msra.mxu0 %v88
    %724 = vmatprep.subr.mxu0 %v85
    %725 = vmatpush1.msra.mxu0 %v84
    %726 = vmatprep.subr.mxu0 %v81
    %727 = vmatpush1.msra.mxu0 %v80
    %728 = vmatprep.subr.mxu0 %v77
    %729 = vmatpush1.msra.mxu0 %v76
    %730 = vmatprep.subr.mxu0 %v73
    %731 = vmatpush1.msra.mxu0 %v72
    %732 = vmatprep.subr.mxu0 %v69
    %733 = vmatpush1.msra.mxu0 %v68
    %734 = vmatprep.subr.mxu0 %v65
    %735 = vmatpush1.msra.mxu0 %v64
    %736 = vmatprep.subr.mxu0 %v61
    %737 = vmatpush1.msra.mxu0 %v60
    %738 = vmatprep.subr.mxu0 %v57
    %739 = vmatpush1.msra.mxu0 %v56
    %740 = vmatprep.subr.mxu0 %v53
    %741 = vmatpush1.msra.mxu0 %v52
    %742 = vmatprep.subr.mxu0 %v49
    %743 = vmatpush1.msra.mxu0 %v48
    %744 = vmatprep.subr.mxu0 0.0
    %745 = vmatpush2.msra.mxu0 0.0
    %746 = vmatprep.subr.mxu0 0.0
    %747 = vmatpush2.msra.mxu0 0.0
    %748 = vmatprep.subr.mxu0 0.0
    %749 = vmatpush2.msra.mxu0 0.0
    %750 = vmatprep.subr.mxu0 0.0
    %751 = vmatpush2.msra.mxu0 0.0
    %752 = vmatprep.subr.mxu0 0.0
    %753 = vmatpush2.msra.mxu0 0.0
    %754 = vmatprep.subr.mxu0 0.0
    %755 = vmatpush2.msra.mxu0 0.0
    %756 = vmatprep.subr.mxu0 0.0
    %757 = vmatpush2.msra.mxu0 0.0
    %758 = vmatprep.subr.mxu0 0.0
    %759 = vmatpush2.msra.mxu0 0.0
    %760 = vmatprep.subr.mxu0 0.0
    %761 = vmatpush2.msra.mxu0 0.0
    %762 = vmatprep.subr.mxu0 0.0
    %763 = vmatpush2.msra.mxu0 0.0
    %764 = vmatprep.subr.mxu0 0.0
    %765 = vmatpush2.msra.mxu0 0.0
    %766 = vmatprep.subr.mxu0 0.0
    %767 = vmatpush2.msra.mxu0 0.0
    %768 = vmatprep.subr.mxu0 0.0
    %769 = vmatpush2.msra.mxu0 0.0
    %770 = vmatprep.subr.mxu0 0.0
    %771 = vmatpush2.msra.mxu0 0.0
    %772 = vmatprep.subr.mxu0 0.0
    %773 = vmatpush2.msra.mxu0 0.0
    %774 = vmatprep.subr.mxu0 0.0
    %775 = vmatpush2.msra.mxu0 0.0
    %776 = vmatprep.mubr.f32.mxu0 0.0
    %777 = vmatmul.mubr.f32.gmra.mxu0 %v635
    %v778 = vpop.f32.mrf.mxu0
    %v779 = vadd.f32 0.0, %v778
    %v780 = vpop.f32.mrf.mxu0
    %v781 = vadd.f32 0.0, %v780
    %782 = vdwg.mxu0
    %v783 = vadd.f32 %v637, %v708
    %v784 = vadd.f32 %v638, %v710
    %v785 = vadd.f32 %v639, %v779
    %v786 = vadd.f32 %v640, %v781
    %v787 = vxor.u32 %v783, 2147483648
    %v788 = vmul.f32 %v787, 1.442695
    %v789 = vpow.pop %v788
    %v790 = vadd.f32 %v789, 1.0
    %v791 = vrcp.pop %v790
    %v792 = vmul.f32 1.0, %v791
    %v793 = vxor.u32 %v784, 2147483648
    %v794 = vmul.f32 %v793, 1.442695
    %v795 = vpow.pop %v794
    %v796 = vadd.f32 %v795, 1.0
    %v797 = vrcp.pop %v796
    %v798 = vmul.f32 1.0, %v797
    %v799 = vtanh.pop %v785
    %v800 = vxor.u32 %v786, 2147483648
    %v801 = vmul.f32 %v800, 1.442695
    %v802 = vpow.pop %v801
    %v803 = vadd.f32 %v802, 1.0
    %v804 = vrcp.pop %v803
    %v805 = vmul.f32 1.0, %v804
    %v806 = vmul.f32 %v798, %v633
    %v807 = vmul.f32 %v792, %v799
    %v808 = vadd.f32 %v806, %v807
    %v809 = vtanh.pop %v808
    %v810 = vmul.f32 %v805, %v809
    %s811 = scalar_lea.vmem [#allocation4], 128
    %v812 = vld [vmem:[%s811] sm:$0xff]
    %v813 = vld [vmem:[%s811 + $0x8] sm:$0xff]
    %v814 = vld [vmem:[%s811 + $0x10] sm:$0xff]
    %v815 = vld [vmem:[%s811 + $0x18] sm:$0xff]
    %816 = vmatprep.subr.mxu0 %v107
    %817 = vmatpush1.msra.mxu0 %v106
    %818 = vmatprep.subr.mxu0 %v103
    %819 = vmatpush1.msra.mxu0 %v102
    %820 = vmatprep.subr.mxu0 %v99
    %821 = vmatpush1.msra.mxu0 %v98
    %822 = vmatprep.subr.mxu0 %v95
    %823 = vmatpush1.msra.mxu0 %v94
    %824 = vmatprep.subr.mxu0 %v91
    %825 = vmatpush1.msra.mxu0 %v90
    %826 = vmatprep.subr.mxu0 %v87
    %827 = vmatpush1.msra.mxu0 %v86
    %828 = vmatprep.subr.mxu0 %v83
    %829 = vmatpush1.msra.mxu0 %v82
    %830 = vmatprep.subr.mxu0 %v79
    %831 = vmatpush1.msra.mxu0 %v78
    %832 = vmatprep.subr.mxu0 %v75
    %833 = vmatpush1.msra.mxu0 %v74
    %834 = vmatprep.subr.mxu0 %v71
    %835 = vmatpush1.msra.mxu0 %v70
    %836 = vmatprep.subr.mxu0 %v67
    %837 = vmatpush1.msra.mxu0 %v66
    %838 = vmatprep.subr.mxu0 %v63
    %839 = vmatpush1.msra.mxu0 %v62
    %840 = vmatprep.subr.mxu0 %v59
    %841 = vmatpush1.msra.mxu0 %v58
    %842 = vmatprep.subr.mxu0 %v55
    %843 = vmatpush1.msra.mxu0 %v54
    %844 = vmatprep.subr.mxu0 %v51
    %845 = vmatpush1.msra.mxu0 %v50
    %846 = vmatprep.subr.mxu0 %v47
    %847 = vmatpush1.msra.mxu0 %v46
    %848 = vmatprep.subr.mxu0 0.0
    %849 = vmatpush2.msra.mxu0 0.0
    %850 = vmatprep.subr.mxu0 0.0
    %851 = vmatpush2.msra.mxu0 0.0
    %852 = vmatprep.subr.mxu0 0.0
    %853 = vmatpush2.msra.mxu0 0.0
    %854 = vmatprep.subr.mxu0 0.0
    %855 = vmatpush2.msra.mxu0 0.0
    %856 = vmatprep.subr.mxu0 0.0
    %857 = vmatpush2.msra.mxu0 0.0
    %858 = vmatprep.subr.mxu0 0.0
    %859 = vmatpush2.msra.mxu0 0.0
    %860 = vmatprep.subr.mxu0 0.0
    %861 = vmatpush2.msra.mxu0 0.0
    %862 = vmatprep.subr.mxu0 0.0
    %863 = vmatpush2.msra.mxu0 0.0
    %864 = vmatprep.subr.mxu0 0.0
    %865 = vmatpush2.msra.mxu0 0.0
    %866 = vmatprep.subr.mxu0 0.0
    %867 = vmatpush2.msra.mxu0 0.0
    %868 = vmatprep.subr.mxu0 0.0
    %869 = vmatpush2.msra.mxu0 0.0
    %870 = vmatprep.subr.mxu0 0.0
    %871 = vmatpush2.msra.mxu0 0.0
    %872 = vmatprep.subr.mxu0 0.0
    %873 = vmatpush2.msra.mxu0 0.0
    %874 = vmatprep.subr.mxu0 0.0
    %875 = vmatpush2.msra.mxu0 0.0
    %876 = vmatprep.subr.mxu0 0.0
    %877 = vmatpush2.msra.mxu0 0.0
    %878 = vmatprep.subr.mxu0 0.0
    %879 = vmatpush2.msra.mxu0 0.0
    %880 = vmatprep.mubr.f32.mxu0 0.0
    %881 = vmatmul.mubr.f32.gmra.mxu0 %v810
    %v882 = vpop.f32.mrf.mxu0
    %v883 = vadd.f32 0.0, %v882
    %v884 = vpop.f32.mrf.mxu0
    %v885 = vadd.f32 0.0, %v884
    %886 = vdwg.mxu0
    %887 = vmatprep.subr.mxu0 %v109
    %888 = vmatpush1.msra.mxu0 %v108
    %889 = vmatprep.subr.mxu0 %v105
    %890 = vmatpush1.msra.mxu0 %v104
    %891 = vmatprep.subr.mxu0 %v101
    %892 = vmatpush1.msra.mxu0 %v100
    %893 = vmatprep.subr.mxu0 %v97
    %894 = vmatpush1.msra.mxu0 %v96
    %895 = vmatprep.subr.mxu0 %v93
    %896 = vmatpush1.msra.mxu0 %v92
    %897 = vmatprep.subr.mxu0 %v89
    %898 = vmatpush1.msra.mxu0 %v88
    %899 = vmatprep.subr.mxu0 %v85
    %900 = vmatpush1.msra.mxu0 %v84
    %901 = vmatprep.subr.mxu0 %v81
    %902 = vmatpush1.msra.mxu0 %v80
    %903 = vmatprep.subr.mxu0 %v77
    %904 = vmatpush1.msra.mxu0 %v76
    %905 = vmatprep.subr.mxu0 %v73
    %906 = vmatpush1.msra.mxu0 %v72
    %907 = vmatprep.subr.mxu0 %v69
    %908 = vmatpush1.msra.mxu0 %v68
    %909 = vmatprep.subr.mxu0 %v65
    %910 = vmatpush1.msra.mxu0 %v64
    %911 = vmatprep.subr.mxu0 %v61
    %912 = vmatpush1.msra.mxu0 %v60
    %913 = vmatprep.subr.mxu0 %v57
    %914 = vmatpush1.msra.mxu0 %v56
    %915 = vmatprep.subr.mxu0 %v53
    %916 = vmatpush1.msra.mxu0 %v52
    %917 = vmatprep.subr.mxu0 %v49
    %918 = vmatpush1.msra.mxu0 %v48
    %919 = vmatprep.subr.mxu0 0.0
    %920 = vmatpush2.msra.mxu0 0.0
    %921 = vmatprep.subr.mxu0 0.0
    %922 = vmatpush2.msra.mxu0 0.0
    %923 = vmatprep.subr.mxu0 0.0
    %924 = vmatpush2.msra.mxu0 0.0
    %925 = vmatprep.subr.mxu0 0.0
    %926 = vmatpush2.msra.mxu0 0.0
    %927 = vmatprep.subr.mxu0 0.0
    %928 = vmatpush2.msra.mxu0 0.0
    %929 = vmatprep.subr.mxu0 0.0
    %930 = vmatpush2.msra.mxu0 0.0
    %931 = vmatprep.subr.mxu0 0.0
    %932 = vmatpush2.msra.mxu0 0.0
    %933 = vmatprep.subr.mxu0 0.0
    %934 = vmatpush2.msra.mxu0 0.0
    %935 = vmatprep.subr.mxu0 0.0
    %936 = vmatpush2.msra.mxu0 0.0
    %937 = vmatprep.subr.mxu0 0.0
    %938 = vmatpush2.msra.mxu0 0.0
    %939 = vmatprep.subr.mxu0 0.0
    %940 = vmatpush2.msra.mxu0 0.0
    %941 = vmatprep.subr.mxu0 0.0
    %942 = vmatpush2.msra.mxu0 0.0
    %943 = vmatprep.subr.mxu0 0.0
    %944 = vmatpush2.msra.mxu0 0.0
    %945 = vmatprep.subr.mxu0 0.0
    %946 = vmatpush2.msra.mxu0 0.0
    %947 = vmatprep.subr.mxu0 0.0
    %948 = vmatpush2.msra.mxu0 0.0
    %949 = vmatprep.subr.mxu0 0.0
    %950 = vmatpush2.msra.mxu0 0.0
    %951 = vmatprep.mubr.f32.mxu0 0.0
    %952 = vmatmul.mubr.f32.gmra.mxu0 %v810
    %v953 = vpop.f32.mrf.mxu0
    %v954 = vadd.f32 0.0, %v953
    %v955 = vpop.f32.mrf.mxu0
    %v956 = vadd.f32 0.0, %v955
    %957 = vdwg.mxu0
    %v958 = vadd.f32 %v812, %v883
    %v959 = vadd.f32 %v813, %v885
    %v960 = vadd.f32 %v814, %v954
    %v961 = vadd.f32 %v815, %v956
    %v962 = vxor.u32 %v958, 2147483648
    %v963 = vmul.f32 %v962, 1.442695
    %v964 = vpow.pop %v963
    %v965 = vadd.f32 %v964, 1.0
    %v966 = vrcp.pop %v965
    %v967 = vmul.f32 1.0, %v966
    %v968 = vxor.u32 %v959, 2147483648
    %v969 = vmul.f32 %v968, 1.442695
    %v970 = vpow.pop %v969
    %v971 = vadd.f32 %v970, 1.0
    %v972 = vrcp.pop %v971
    %v973 = vmul.f32 1.0, %v972
    %v974 = vtanh.pop %v960
    %v975 = vxor.u32 %v961, 2147483648
    %v976 = vmul.f32 %v975, 1.442695
    %v977 = vpow.pop %v976
    %v978 = vadd.f32 %v977, 1.0
    %v979 = vrcp.pop %v978
    %v980 = vmul.f32 1.0, %v979
    %v981 = vmul.f32 %v973, %v808
    %v982 = vmul.f32 %v967, %v974
    %v983 = vadd.f32 %v981, %v982
    %v984 = vtanh.pop %v983
    %v985 = vmul.f32 %v980, %v984
    %s986 = scalar_lea.vmem [#allocation4], 160
    %v987 = vld [vmem:[%s986] sm:$0xff]
    %v988 = vld [vmem:[%s986 + $0x8] sm:$0xff]
    %v989 = vld [vmem:[%s986 + $0x10] sm:$0xff]
    %v990 = vld [vmem:[%s986 + $0x18] sm:$0xff]
    %991 = vmatprep.subr.mxu0 %v107
    %992 = vmatpush1.msra.mxu0 %v106
    %993 = vmatprep.subr.mxu0 %v103
    %994 = vmatpush1.msra.mxu0 %v102
    %995 = vmatprep.subr.mxu0 %v99
    %996 = vmatpush1.msra.mxu0 %v98
    %997 = vmatprep.subr.mxu0 %v95
    %998 = vmatpush1.msra.mxu0 %v94
    %999 = vmatprep.subr.mxu0 %v91
    %1000 = vmatpush1.msra.mxu0 %v90
    %1001 = vmatprep.subr.mxu0 %v87
    %1002 = vmatpush1.msra.mxu0 %v86
    %1003 = vmatprep.subr.mxu0 %v83
    %1004 = vmatpush1.msra.mxu0 %v82
    %1005 = vmatprep.subr.mxu0 %v79
    %1006 = vmatpush1.msra.mxu0 %v78
    %1007 = vmatprep.subr.mxu0 %v75
    %1008 = vmatpush1.msra.mxu0 %v74
    %1009 = vmatprep.subr.mxu0 %v71
    %1010 = vmatpush1.msra.mxu0 %v70
    %1011 = vmatprep.subr.mxu0 %v67
    %1012 = vmatpush1.msra.mxu0 %v66
    %1013 = vmatprep.subr.mxu0 %v63
    %1014 = vmatpush1.msra.mxu0 %v62
    %1015 = vmatprep.subr.mxu0 %v59
    %1016 = vmatpush1.msra.mxu0 %v58
    %1017 = vmatprep.subr.mxu0 %v55
    %1018 = vmatpush1.msra.mxu0 %v54
    %1019 = vmatprep.subr.mxu0 %v51
    %1020 = vmatpush1.msra.mxu0 %v50
    %1021 = vmatprep.subr.mxu0 %v47
    %1022 = vmatpush1.msra.mxu0 %v46
    %1023 = vmatprep.subr.mxu0 0.0
    %1024 = vmatpush2.msra.mxu0 0.0
    %1025 = vmatprep.subr.mxu0 0.0
    %1026 = vmatpush2.msra.mxu0 0.0
    %1027 = vmatprep.subr.mxu0 0.0
    %1028 = vmatpush2.msra.mxu0 0.0
    %1029 = vmatprep.subr.mxu0 0.0
    %1030 = vmatpush2.msra.mxu0 0.0
    %1031 = vmatprep.subr.mxu0 0.0
    %1032 = vmatpush2.msra.mxu0 0.0
    %1033 = vmatprep.subr.mxu0 0.0
    %1034 = vmatpush2.msra.mxu0 0.0
    %1035 = vmatprep.subr.mxu0 0.0
    %1036 = vmatpush2.msra.mxu0 0.0
    %1037 = vmatprep.subr.mxu0 0.0
    %1038 = vmatpush2.msra.mxu0 0.0
    %1039 = vmatprep.subr.mxu0 0.0
    %1040 = vmatpush2.msra.mxu0 0.0
    %1041 = vmatprep.subr.mxu0 0.0
    %1042 = vmatpush2.msra.mxu0 0.0
    %1043 = vmatprep.subr.mxu0 0.0
    %1044 = vmatpush2.msra.mxu0 0.0
    %1045 = vmatprep.subr.mxu0 0.0
    %1046 = vmatpush2.msra.mxu0 0.0
    %1047 = vmatprep.subr.mxu0 0.0
    %1048 = vmatpush2.msra.mxu0 0.0
    %1049 = vmatprep.subr.mxu0 0.0
    %1050 = vmatpush2.msra.mxu0 0.0
    %1051 = vmatprep.subr.mxu0 0.0
    %1052 = vmatpush2.msra.mxu0 0.0
    %1053 = vmatprep.subr.mxu0 0.0
    %1054 = vmatpush2.msra.mxu0 0.0
    %1055 = vmatprep.mubr.f32.mxu0 0.0
    %1056 = vmatmul.mubr.f32.gmra.mxu0 %v985
    %v1057 = vpop.f32.mrf.mxu0
    %v1058 = vadd.f32 0.0, %v1057
    %v1059 = vpop.f32.mrf.mxu0
    %v1060 = vadd.f32 0.0, %v1059
    %1061 = vdwg.mxu0
    %1062 = vmatprep.subr.mxu0 %v109
    %1063 = vmatpush1.msra.mxu0 %v108
    %1064 = vmatprep.subr.mxu0 %v105
    %1065 = vmatpush1.msra.mxu0 %v104
    %1066 = vmatprep.subr.mxu0 %v101
    %1067 = vmatpush1.msra.mxu0 %v100
    %1068 = vmatprep.subr.mxu0 %v97
    %1069 = vmatpush1.msra.mxu0 %v96
    %1070 = vmatprep.subr.mxu0 %v93
    %1071 = vmatpush1.msra.mxu0 %v92
    %1072 = vmatprep.subr.mxu0 %v89
    %1073 = vmatpush1.msra.mxu0 %v88
    %1074 = vmatprep.subr.mxu0 %v85
    %1075 = vmatpush1.msra.mxu0 %v84
    %1076 = vmatprep.subr.mxu0 %v81
    %1077 = vmatpush1.msra.mxu0 %v80
    %1078 = vmatprep.subr.mxu0 %v77
    %1079 = vmatpush1.msra.mxu0 %v76
    %1080 = vmatprep.subr.mxu0 %v73
    %1081 = vmatpush1.msra.mxu0 %v72
    %1082 = vmatprep.subr.mxu0 %v69
    %1083 = vmatpush1.msra.mxu0 %v68
    %1084 = vmatprep.subr.mxu0 %v65
    %1085 = vmatpush1.msra.mxu0 %v64
    %1086 = vmatprep.subr.mxu0 %v61
    %1087 = vmatpush1.msra.mxu0 %v60
    %1088 = vmatprep.subr.mxu0 %v57
    %1089 = vmatpush1.msra.mxu0 %v56
    %1090 = vmatprep.subr.mxu0 %v53
    %1091 = vmatpush1.msra.mxu0 %v52
    %1092 = vmatprep.subr.mxu0 %v49
    %1093 = vmatpush1.msra.mxu0 %v48
    %1094 = vmatprep.subr.mxu0 0.0
    %1095 = vmatpush2.msra.mxu0 0.0
    %1096 = vmatprep.subr.mxu0 0.0
    %1097 = vmatpush2.msra.mxu0 0.0
    %1098 = vmatprep.subr.mxu0 0.0
    %1099 = vmatpush2.msra.mxu0 0.0
    %1100 = vmatprep.subr.mxu0 0.0
    %1101 = vmatpush2.msra.mxu0 0.0
    %1102 = vmatprep.subr.mxu0 0.0
    %1103 = vmatpush2.msra.mxu0 0.0
    %1104 = vmatprep.subr.mxu0 0.0
    %1105 = vmatpush2.msra.mxu0 0.0
    %1106 = vmatprep.subr.mxu0 0.0
    %1107 = vmatpush2.msra.mxu0 0.0
    %1108 = vmatprep.subr.mxu0 0.0
    %1109 = vmatpush2.msra.mxu0 0.0
    %1110 = vmatprep.subr.mxu0 0.0
    %1111 = vmatpush2.msra.mxu0 0.0
    %1112 = vmatprep.subr.mxu0 0.0
    %1113 = vmatpush2.msra.mxu0 0.0
    %1114 = vmatprep.subr.mxu0 0.0
    %1115 = vmatpush2.msra.mxu0 0.0
    %1116 = vmatprep.subr.mxu0 0.0
    %1117 = vmatpush2.msra.mxu0 0.0
    %1118 = vmatprep.subr.mxu0 0.0
    %1119 = vmatpush2.msra.mxu0 0.0
    %1120 = vmatprep.subr.mxu0 0.0
    %1121 = vmatpush2.msra.mxu0 0.0
    %1122 = vmatprep.subr.mxu0 0.0
    %1123 = vmatpush2.msra.mxu0 0.0
    %1124 = vmatprep.subr.mxu0 0.0
    %1125 = vmatpush2.msra.mxu0 0.0
    %1126 = vmatprep.mubr.f32.mxu0 0.0
    %1127 = vmatmul.mubr.f32.gmra.mxu0 %v985
    %v1128 = vpop.f32.mrf.mxu0
    %v1129 = vadd.f32 0.0, %v1128
    %v1130 = vpop.f32.mrf.mxu0
    %v1131 = vadd.f32 0.0, %v1130
    %1132 = vdwg.mxu0
    %v1133 = vadd.f32 %v987, %v1058
    %v1134 = vadd.f32 %v988, %v1060
    %v1135 = vadd.f32 %v989, %v1129
    %v1136 = vadd.f32 %v990, %v1131
    %v1137 = vxor.u32 %v1133, 2147483648
    %v1138 = vmul.f32 %v1137, 1.442695
    %v1139 = vpow.pop %v1138
    %v1140 = vadd.f32 %v1139, 1.0
    %v1141 = vrcp.pop %v1140
    %v1142 = vmul.f32 1.0, %v1141
    %v1143 = vxor.u32 %v1134, 2147483648
    %v1144 = vmul.f32 %v1143, 1.442695
    %v1145 = vpow.pop %v1144
    %v1146 = vadd.f32 %v1145, 1.0
    %v1147 = vrcp.pop %v1146
    %v1148 = vmul.f32 1.0, %v1147
    %v1149 = vtanh.pop %v1135
    %v1150 = vxor.u32 %v1136, 2147483648
    %v1151 = vmul.f32 %v1150, 1.442695
    %v1152 = vpow.pop %v1151
    %v1153 = vadd.f32 %v1152, 1.0
    %v1154 = vrcp.pop %v1153
    %v1155 = vmul.f32 1.0, %v1154
    %v1156 = vmul.f32 %v1148, %v983
    %v1157 = vmul.f32 %v1142, %v1149
    %v1158 = vadd.f32 %v1156, %v1157
    %v1159 = vtanh.pop %v1158
    %v1160 = vmul.f32 %v1155, %v1159
    %s1161 = scalar_lea.vmem [#allocation4], 192
    %v1162 = vld [vmem:[%s1161] sm:$0xff]
    %v1163 = vld [vmem:[%s1161 + $0x8] sm:$0xff]
    %v1164 = vld [vmem:[%s1161 + $0x10] sm:$0xff]
    %v1165 = vld [vmem:[%s1161 + $0x18] sm:$0xff]
    %1166 = vmatprep.subr.mxu0 %v107
    %1167 = vmatpush1.msra.mxu0 %v106
    %1168 = vmatprep.subr.mxu0 %v103
    %1169 = vmatpush1.msra.mxu0 %v102
    %1170 = vmatprep.subr.mxu0 %v99
    %1171 = vmatpush1.msra.mxu0 %v98
    %1172 = vmatprep.subr.mxu0 %v95
    %1173 = vmatpush1.msra.mxu0 %v94
    %1174 = vmatprep.subr.mxu0 %v91
    %1175 = vmatpush1.msra.mxu0 %v90
    %1176 = vmatprep.subr.mxu0 %v87
    %1177 = vmatpush1.msra.mxu0 %v86
    %1178 = vmatprep.subr.mxu0 %v83
    %1179 = vmatpush1.msra.mxu0 %v82
    %1180 = vmatprep.subr.mxu0 %v79
    %1181 = vmatpush1.msra.mxu0 %v78
    %1182 = vmatprep.subr.mxu0 %v75
    %1183 = vmatpush1.msra.mxu0 %v74
    %1184 = vmatprep.subr.mxu0 %v71
    %1185 = vmatpush1.msra.mxu0 %v70
    %1186 = vmatprep.subr.mxu0 %v67
    %1187 = vmatpush1.msra.mxu0 %v66
    %1188 = vmatprep.subr.mxu0 %v63
    %1189 = vmatpush1.msra.mxu0 %v62
    %1190 = vmatprep.subr.mxu0 %v59
    %1191 = vmatpush1.msra.mxu0 %v58
    %1192 = vmatprep.subr.mxu0 %v55
    %1193 = vmatpush1.msra.mxu0 %v54
    %1194 = vmatprep.subr.mxu0 %v51
    %1195 = vmatpush1.msra.mxu0 %v50
    %1196 = vmatprep.subr.mxu0 %v47
    %1197 = vmatpush1.msra.mxu0 %v46
    %1198 = vmatprep.subr.mxu0 0.0
    %1199 = vmatpush2.msra.mxu0 0.0
    %1200 = vmatprep.subr.mxu0 0.0
    %1201 = vmatpush2.msra.mxu0 0.0
    %1202 = vmatprep.subr.mxu0 0.0
    %1203 = vmatpush2.msra.mxu0 0.0
    %1204 = vmatprep.subr.mxu0 0.0
    %1205 = vmatpush2.msra.mxu0 0.0
    %1206 = vmatprep.subr.mxu0 0.0
    %1207 = vmatpush2.msra.mxu0 0.0
    %1208 = vmatprep.subr.mxu0 0.0
    %1209 = vmatpush2.msra.mxu0 0.0
    %1210 = vmatprep.subr.mxu0 0.0
    %1211 = vmatpush2.msra.mxu0 0.0
    %1212 = vmatprep.subr.mxu0 0.0
    %1213 = vmatpush2.msra.mxu0 0.0
    %1214 = vmatprep.subr.mxu0 0.0
    %1215 = vmatpush2.msra.mxu0 0.0
    %1216 = vmatprep.subr.mxu0 0.0
    %1217 = vmatpush2.msra.mxu0 0.0
    %1218 = vmatprep.subr.mxu0 0.0
    %1219 = vmatpush2.msra.mxu0 0.0
    %1220 = vmatprep.subr.mxu0 0.0
    %1221 = vmatpush2.msra.mxu0 0.0
    %1222 = vmatprep.subr.mxu0 0.0
    %1223 = vmatpush2.msra.mxu0 0.0
    %1224 = vmatprep.subr.mxu0 0.0
    %1225 = vmatpush2.msra.mxu0 0.0
    %1226 = vmatprep.subr.mxu0 0.0
    %1227 = vmatpush2.msra.mxu0 0.0
    %1228 = vmatprep.subr.mxu0 0.0
    %1229 = vmatpush2.msra.mxu0 0.0
    %1230 = vmatprep.mubr.f32.mxu0 0.0
    %1231 = vmatmul.mubr.f32.gmra.mxu0 %v1160
    %v1232 = vpop.f32.mrf.mxu0
    %v1233 = vadd.f32 0.0, %v1232
    %v1234 = vpop.f32.mrf.mxu0
    %v1235 = vadd.f32 0.0, %v1234
    %1236 = vdwg.mxu0
    %1237 = vmatprep.subr.mxu0 %v109
    %1238 = vmatpush1.msra.mxu0 %v108
    %1239 = vmatprep.subr.mxu0 %v105
    %1240 = vmatpush1.msra.mxu0 %v104
    %1241 = vmatprep.subr.mxu0 %v101
    %1242 = vmatpush1.msra.mxu0 %v100
    %1243 = vmatprep.subr.mxu0 %v97
    %1244 = vmatpush1.msra.mxu0 %v96
    %1245 = vmatprep.subr.mxu0 %v93
    %1246 = vmatpush1.msra.mxu0 %v92
    %1247 = vmatprep.subr.mxu0 %v89
    %1248 = vmatpush1.msra.mxu0 %v88
    %1249 = vmatprep.subr.mxu0 %v85
    %1250 = vmatpush1.msra.mxu0 %v84
    %1251 = vmatprep.subr.mxu0 %v81
    %1252 = vmatpush1.msra.mxu0 %v80
    %1253 = vmatprep.subr.mxu0 %v77
    %1254 = vmatpush1.msra.mxu0 %v76
    %1255 = vmatprep.subr.mxu0 %v73
    %1256 = vmatpush1.msra.mxu0 %v72
    %1257 = vmatprep.subr.mxu0 %v69
    %1258 = vmatpush1.msra.mxu0 %v68
    %1259 = vmatprep.subr.mxu0 %v65
    %1260 = vmatpush1.msra.mxu0 %v64
    %1261 = vmatprep.subr.mxu0 %v61
    %1262 = vmatpush1.msra.mxu0 %v60
    %1263 = vmatprep.subr.mxu0 %v57
    %1264 = vmatpush1.msra.mxu0 %v56
    %1265 = vmatprep.subr.mxu0 %v53
    %1266 = vmatpush1.msra.mxu0 %v52
    %1267 = vmatprep.subr.mxu0 %v49
    %1268 = vmatpush1.msra.mxu0 %v48
    %1269 = vmatprep.subr.mxu0 0.0
    %1270 = vmatpush2.msra.mxu0 0.0
    %1271 = vmatprep.subr.mxu0 0.0
    %1272 = vmatpush2.msra.mxu0 0.0
    %1273 = vmatprep.subr.mxu0 0.0
    %1274 = vmatpush2.msra.mxu0 0.0
    %1275 = vmatprep.subr.mxu0 0.0
    %1276 = vmatpush2.msra.mxu0 0.0
    %1277 = vmatprep.subr.mxu0 0.0
    %1278 = vmatpush2.msra.mxu0 0.0
    %1279 = vmatprep.subr.mxu0 0.0
    %1280 = vmatpush2.msra.mxu0 0.0
    %1281 = vmatprep.subr.mxu0 0.0
    %1282 = vmatpush2.msra.mxu0 0.0
    %1283 = vmatprep.subr.mxu0 0.0
    %1284 = vmatpush2.msra.mxu0 0.0
    %1285 = vmatprep.subr.mxu0 0.0
    %1286 = vmatpush2.msra.mxu0 0.0
    %1287 = vmatprep.subr.mxu0 0.0
    %1288 = vmatpush2.msra.mxu0 0.0
    %1289 = vmatprep.subr.mxu0 0.0
    %1290 = vmatpush2.msra.mxu0 0.0
    %1291 = vmatprep.subr.mxu0 0.0
    %1292 = vmatpush2.msra.mxu0 0.0
    %1293 = vmatprep.subr.mxu0 0.0
    %1294 = vmatpush2.msra.mxu0 0.0
    %1295 = vmatprep.subr.mxu0 0.0
    %1296 = vmatpush2.msra.mxu0 0.0
    %1297 = vmatprep.subr.mxu0 0.0
    %1298 = vmatpush2.msra.mxu0 0.0
    %1299 = vmatprep.subr.mxu0 0.0
    %1300 = vmatpush2.msra.mxu0 0.0
    %1301 = vmatprep.mubr.f32.mxu0 0.0
    %1302 = vmatmul.mubr.f32.gmra.mxu0 %v1160
    %v1303 = vpop.f32.mrf.mxu0
    %v1304 = vadd.f32 0.0, %v1303
    %v1305 = vpop.f32.mrf.mxu0
    %v1306 = vadd.f32 0.0, %v1305
    %1307 = vdwg.mxu0
    %v1308 = vadd.f32 %v1162, %v1233
    %v1309 = vadd.f32 %v1163, %v1235
    %v1310 = vadd.f32 %v1164, %v1304
    %v1311 = vadd.f32 %v1165, %v1306
    %v1312 = vxor.u32 %v1308, 2147483648
    %v1313 = vmul.f32 %v1312, 1.442695
    %v1314 = vpow.pop %v1313
    %v1315 = vadd.f32 %v1314, 1.0
    %v1316 = vrcp.pop %v1315
    %v1317 = vmul.f32 1.0, %v1316
    %v1318 = vxor.u32 %v1309, 2147483648
    %v1319 = vmul.f32 %v1318, 1.442695
    %v1320 = vpow.pop %v1319
    %v1321 = vadd.f32 %v1320, 1.0
    %v1322 = vrcp.pop %v1321
    %v1323 = vmul.f32 1.0, %v1322
    %v1324 = vtanh.pop %v1310
    %v1325 = vxor.u32 %v1311, 2147483648
    %v1326 = vmul.f32 %v1325, 1.442695
    %v1327 = vpow.pop %v1326
    %v1328 = vadd.f32 %v1327, 1.0
    %v1329 = vrcp.pop %v1328
    %v1330 = vmul.f32 1.0, %v1329
    %v1331 = vmul.f32 %v1323, %v1158
    %v1332 = vmul.f32 %v1317, %v1324
    %v1333 = vadd.f32 %v1331, %v1332
    %v1334 = vtanh.pop %v1333
    %v1335 = vmul.f32 %v1330, %v1334
    %s1336 = scalar_lea.vmem [#allocation4], 224
    %v1337 = vld [vmem:[%s1336] sm:$0xff]
    %v1338 = vld [vmem:[%s1336 + $0x8] sm:$0xff]
    %v1339 = vld [vmem:[%s1336 + $0x10] sm:$0xff]
    %v1340 = vld [vmem:[%s1336 + $0x18] sm:$0xff]
    %1341 = vmatprep.subr.mxu0 %v107
    %1342 = vmatpush1.msra.mxu0 %v106
    %1343 = vmatprep.subr.mxu0 %v103
    %1344 = vmatpush1.msra.mxu0 %v102
    %1345 = vmatprep.subr.mxu0 %v99
    %1346 = vmatpush1.msra.mxu0 %v98
    %1347 = vmatprep.subr.mxu0 %v95
    %1348 = vmatpush1.msra.mxu0 %v94
    %1349 = vmatprep.subr.mxu0 %v91
    %1350 = vmatpush1.msra.mxu0 %v90
    %1351 = vmatprep.subr.mxu0 %v87
    %1352 = vmatpush1.msra.mxu0 %v86
    %1353 = vmatprep.subr.mxu0 %v83
    %1354 = vmatpush1.msra.mxu0 %v82
    %1355 = vmatprep.subr.mxu0 %v79
    %1356 = vmatpush1.msra.mxu0 %v78
    %1357 = vmatprep.subr.mxu0 %v75
    %1358 = vmatpush1.msra.mxu0 %v74
    %1359 = vmatprep.subr.mxu0 %v71
    %1360 = vmatpush1.msra.mxu0 %v70
    %1361 = vmatprep.subr.mxu0 %v67
    %1362 = vmatpush1.msra.mxu0 %v66
    %1363 = vmatprep.subr.mxu0 %v63
    %1364 = vmatpush1.msra.mxu0 %v62
    %1365 = vmatprep.subr.mxu0 %v59
    %1366 = vmatpush1.msra.mxu0 %v58
    %1367 = vmatprep.subr.mxu0 %v55
    %1368 = vmatpush1.msra.mxu0 %v54
    %1369 = vmatprep.subr.mxu0 %v51
    %1370 = vmatpush1.msra.mxu0 %v50
    %1371 = vmatprep.subr.mxu0 %v47
    %1372 = vmatpush1.msra.mxu0 %v46
    %1373 = vmatprep.subr.mxu0 0.0
    %1374 = vmatpush2.msra.mxu0 0.0
    %1375 = vmatprep.subr.mxu0 0.0
    %1376 = vmatpush2.msra.mxu0 0.0
    %1377 = vmatprep.subr.mxu0 0.0
    %1378 = vmatpush2.msra.mxu0 0.0
    %1379 = vmatprep.subr.mxu0 0.0
    %1380 = vmatpush2.msra.mxu0 0.0
    %1381 = vmatprep.subr.mxu0 0.0
    %1382 = vmatpush2.msra.mxu0 0.0
    %1383 = vmatprep.subr.mxu0 0.0
    %1384 = vmatpush2.msra.mxu0 0.0
    %1385 = vmatprep.subr.mxu0 0.0
    %1386 = vmatpush2.msra.mxu0 0.0
    %1387 = vmatprep.subr.mxu0 0.0
    %1388 = vmatpush2.msra.mxu0 0.0
    %1389 = vmatprep.subr.mxu0 0.0
    %1390 = vmatpush2.msra.mxu0 0.0
    %1391 = vmatprep.subr.mxu0 0.0
    %1392 = vmatpush2.msra.mxu0 0.0
    %1393 = vmatprep.subr.mxu0 0.0
    %1394 = vmatpush2.msra.mxu0 0.0
    %1395 = vmatprep.subr.mxu0 0.0
    %1396 = vmatpush2.msra.mxu0 0.0
    %1397 = vmatprep.subr.mxu0 0.0
    %1398 = vmatpush2.msra.mxu0 0.0
    %1399 = vmatprep.subr.mxu0 0.0
    %1400 = vmatpush2.msra.mxu0 0.0
    %1401 = vmatprep.subr.mxu0 0.0
    %1402 = vmatpush2.msra.mxu0 0.0
    %1403 = vmatprep.subr.mxu0 0.0
    %1404 = vmatpush2.msra.mxu0 0.0
    %1405 = vmatprep.mubr.f32.mxu0 0.0
    %1406 = vmatmul.mubr.f32.gmra.mxu0 %v1335
    %v1407 = vpop.f32.mrf.mxu0
    %v1408 = vadd.f32 0.0, %v1407
    %v1409 = vpop.f32.mrf.mxu0
    %v1410 = vadd.f32 0.0, %v1409
    %1411 = vdwg.mxu0
    %1412 = vmatprep.subr.mxu0 %v109
    %1413 = vmatpush1.msra.mxu0 %v108
    %1414 = vmatprep.subr.mxu0 %v105
    %1415 = vmatpush1.msra.mxu0 %v104
    %1416 = vmatprep.subr.mxu0 %v101
    %1417 = vmatpush1.msra.mxu0 %v100
    %1418 = vmatprep.subr.mxu0 %v97
    %1419 = vmatpush1.msra.mxu0 %v96
    %1420 = vmatprep.subr.mxu0 %v93
    %1421 = vmatpush1.msra.mxu0 %v92
    %1422 = vmatprep.subr.mxu0 %v89
    %1423 = vmatpush1.msra.mxu0 %v88
    %1424 = vmatprep.subr.mxu0 %v85
    %1425 = vmatpush1.msra.mxu0 %v84
    %1426 = vmatprep.subr.mxu0 %v81
    %1427 = vmatpush1.msra.mxu0 %v80
    %1428 = vmatprep.subr.mxu0 %v77
    %1429 = vmatpush1.msra.mxu0 %v76
    %1430 = vmatprep.subr.mxu0 %v73
    %1431 = vmatpush1.msra.mxu0 %v72
    %1432 = vmatprep.subr.mxu0 %v69
    %1433 = vmatpush1.msra.mxu0 %v68
    %1434 = vmatprep.subr.mxu0 %v65
    %1435 = vmatpush1.msra.mxu0 %v64
    %1436 = vmatprep.subr.mxu0 %v61
    %1437 = vmatpush1.msra.mxu0 %v60
    %1438 = vmatprep.subr.mxu0 %v57
    %1439 = vmatpush1.msra.mxu0 %v56
    %1440 = vmatprep.subr.mxu0 %v53
    %1441 = vmatpush1.msra.mxu0 %v52
    %1442 = vmatprep.subr.mxu0 %v49
    %1443 = vmatpush1.msra.mxu0 %v48
    %1444 = vmatprep.subr.mxu0 0.0
    %1445 = vmatpush2.msra.mxu0 0.0
    %1446 = vmatprep.subr.mxu0 0.0
    %1447 = vmatpush2.msra.mxu0 0.0
    %1448 = vmatprep.subr.mxu0 0.0
    %1449 = vmatpush2.msra.mxu0 0.0
    %1450 = vmatprep.subr.mxu0 0.0
    %1451 = vmatpush2.msra.mxu0 0.0
    %1452 = vmatprep.subr.mxu0 0.0
    %1453 = vmatpush2.msra.mxu0 0.0
    %1454 = vmatprep.subr.mxu0 0.0
    %1455 = vmatpush2.msra.mxu0 0.0
    %1456 = vmatprep.subr.mxu0 0.0
    %1457 = vmatpush2.msra.mxu0 0.0
    %1458 = vmatprep.subr.mxu0 0.0
    %1459 = vmatpush2.msra.mxu0 0.0
    %1460 = vmatprep.subr.mxu0 0.0
    %1461 = vmatpush2.msra.mxu0 0.0
    %1462 = vmatprep.subr.mxu0 0.0
    %1463 = vmatpush2.msra.mxu0 0.0
    %1464 = vmatprep.subr.mxu0 0.0
    %1465 = vmatpush2.msra.mxu0 0.0
    %1466 = vmatprep.subr.mxu0 0.0
    %1467 = vmatpush2.msra.mxu0 0.0
    %1468 = vmatprep.subr.mxu0 0.0
    %1469 = vmatpush2.msra.mxu0 0.0
    %1470 = vmatprep.subr.mxu0 0.0
    %1471 = vmatpush2.msra.mxu0 0.0
    %1472 = vmatprep.subr.mxu0 0.0
    %1473 = vmatpush2.msra.mxu0 0.0
    %1474 = vmatprep.subr.mxu0 0.0
    %1475 = vmatpush2.msra.mxu0 0.0
    %1476 = vmatprep.mubr.f32.mxu0 0.0
    %1477 = vmatmul.mubr.f32.gmra.mxu0 %v1335
    %v1478 = vpop.f32.mrf.mxu0
    %v1479 = vadd.f32 0.0, %v1478
    %v1480 = vpop.f32.mrf.mxu0
    %v1481 = vadd.f32 0.0, %v1480
    %1482 = vdwg.mxu0
    %v1483 = vadd.f32 %v1337, %v1408
    %v1484 = vadd.f32 %v1338, %v1410
    %v1485 = vadd.f32 %v1339, %v1479
    %v1486 = vadd.f32 %v1340, %v1481
    %v1487 = vxor.u32 %v1483, 2147483648
    %v1488 = vmul.f32 %v1487, 1.442695
    %v1489 = vpow.pop %v1488
    %v1490 = vadd.f32 %v1489, 1.0
    %v1491 = vrcp.pop %v1490
    %v1492 = vmul.f32 1.0, %v1491
    %v1493 = vxor.u32 %v1484, 2147483648
    %v1494 = vmul.f32 %v1493, 1.442695
    %v1495 = vpow.pop %v1494
    %v1496 = vadd.f32 %v1495, 1.0
    %v1497 = vrcp.pop %v1496
    %v1498 = vmul.f32 1.0, %v1497
    %v1499 = vtanh.pop %v1485
    %v1500 = vxor.u32 %v1486, 2147483648
    %v1501 = vmul.f32 %v1500, 1.442695
    %v1502 = vpow.pop %v1501
    %v1503 = vadd.f32 %v1502, 1.0
    %v1504 = vrcp.pop %v1503
    %v1505 = vmul.f32 1.0, %v1504
    %v1506 = vmul.f32 %v1498, %v1333
    %v1507 = vmul.f32 %v1492, %v1499
    %v1508 = vadd.f32 %v1506, %v1507
    %v1509 = vtanh.pop %v1508
    %v1510 = vmul.f32 %v1505, %v1509
    %1511 = vst [vmem:[#allocation2] sm:$0xff] %v1510
    %1512 = vst [vmem:[#allocation3] sm:$0xff] %v1508
    // Predicated region
    $region22: #{tpu_custom_call.1} parent=1 // pred_check
      %p1513 = pneg %p40
    $region23: #{tpu_custom_call.1} parent=1 // pred_check_branch
      %1515 = sbr.rel (%p1513) target = $region25
    $region24: #{tpu_custom_call.1} parent=1 // pred_region
      %1516 = vst [vmem:[#allocation9] sm:$0xff] %v1510
    $region25: #{tpu_custom_call.1} parent=1 // pred_fallthru
      _
    // Predicated region
    $region26: #{tpu_custom_call.1} parent=1 // pred_check
      _
    $region27: #{tpu_custom_call.1} parent=1 // pred_check_branch
      %1518 = sbr.rel (0) target = $region29
    $region28: #{tpu_custom_call.1} parent=1 // pred_region
      %s1520 = ssub.s32 128, 128
      %1521 = vsyncadd [#allocation6], %s1520
      %s1523 = sshll.u32 [#allocation9], 4
      %s1524 = int_to_ptr.vmem [resolvable:$true] %s1523
      %1526 = dma.vmem_to_hbm [thread:$0]  %s1524, 128, %s2, [#allocation6]
    $region29: #{tpu_custom_call.1} parent=1 // pred_fallthru
      _
    // Predicated region
    $region30: #{tpu_custom_call.1} parent=1 // pred_check
      _
    $region31: #{tpu_custom_call.1} parent=1 // pred_check_branch
      %1528 = sbr.rel (0) target = $region33
    $region32: #{tpu_custom_call.1} parent=1 // pred_region
      %1529 = dma.done [#allocation6], 128
    $region33: #{tpu_custom_call.1} parent=1 // pred_fallthru
      _
    %1530 = vsyncpa [#allocation5], 1
    %1531 = vsyncpa [#allocation8], 1
    %1532 = vsyncpa [#allocation6], 1

</llo_original>
